<compile_context>
chip_gen: v7x
topology: tpu7x:2x2x1
jax: 0.10.0
libtpu: 0.0.40
codegen_flags: <defaults>
</compile_context>

<pallas_src>
import jax
import jax.numpy as jnp
from jax.experimental import pallas as pl
from jax.experimental.pallas import tpu as pltpu

EPS = 1e-5
LANE = 128


def _round_up(x, m):
    return (x + m - 1) // m * m


# ---------------------------------------------------------------------------
# Fused kernel: all GCN layers + global mean pool + Linear + log_softmax
# grid = (num_layers, num_row_tiles)  -- both axes sequential ("arbitrary")
# ---------------------------------------------------------------------------
def _make_fused_kernel(tm, num_classes, n_layers, n_tiles):
    def kernel(a_ref, x_hbm, w_ref, b_ref, p_ref, wlin_ref, blin_ref,   # inputs
               out_ref,                                                 # output
               h0_ref, h1_ref, pooled_ref, x_sem):                      # scratch
        l = pl.program_id(0)           # GCN layer index
        i = pl.program_id(1)           # node row-tile index
        last_layer = l == n_layers - 1

        # Once, at the very first grid step: DMA padded X (HBM) into the layer-0 input buffer.
        @pl.when(jnp.logical_and(l == 0, i == 0))
        def _():
            cp = pltpu.make_async_copy(x_hbm, h0_ref, x_sem)
            cp.start()
            cp.wait()

        # Zero the pooled accumulator when the last layer starts.
        @pl.when(jnp.logical_and(last_layer, i == 0))
        def _():
            pooled_ref[...] = jnp.zeros_like(pooled_ref)

        row = pl.multiple_of(i * tm, tm)

        def layer_step(h_in_ref, h_out_ref):
            # H_out[rows] = relu((A_hat[rows, :] @ H_in) @ W' + b')
            t = jnp.dot(a_ref[...], h_in_ref[...], preferred_element_type=jnp.float32)
            h = jnp.dot(t.astype(jnp.bfloat16), w_ref[...], preferred_element_type=jnp.float32)
            h = jnp.maximum(h + b_ref[...], 0.0)
            h_bf = h.astype(jnp.bfloat16)
            # NOTE: padded A rows make padded H rows = relu(b') (nonzero); harmless because the
            # padded *columns* of A and P are zero, so padded rows never feed downstream compute.
            h_out_ref[pl.ds(row, tm), :] = h_bf

            # Fused global mean pooling on the last layer: pooled += P[:, rows] @ H_out[rows].
            @pl.when(last_layer)
            def _():
                pooled_ref[...] += jnp.dot(p_ref[...], h_bf,
                                           preferred_element_type=jnp.float32)

        # Ping-pong H buffers by layer parity (both grid axes are sequential -> no RAW hazards).
        @pl.when(l % 2 == 0)
        def _():
            layer_step(h0_ref, h1_ref)

        @pl.when(l % 2 == 1)
        def _():
            layer_step(h1_ref, h0_ref)

        # Epilogue on the final grid step: classifier + masked log_softmax over padded lanes.
        @pl.when(jnp.logical_and(last_layer, i == n_tiles - 1))
        def _():
            logits = jnp.dot(pooled_ref[...].astype(jnp.bfloat16), wlin_ref[...],
                             preferred_element_type=jnp.float32) + blin_ref[...]
            lane = jax.lax.broadcasted_iota(jnp.int32, logits.shape, 1)
            valid = lane < num_classes
            neg = jnp.finfo(jnp.float32).min
            masked = jnp.where(valid, logits, neg)
            m = jnp.max(masked, axis=-1, keepdims=True)
            z = masked - m
            sumexp = jnp.sum(jnp.where(valid, jnp.exp(z), 0.0), axis=-1, keepdims=True)
            out_ref[...] = z - jnp.log(sumexp)

    return kernel


def fused_graphnet_call(a_hat_p, x_p, w_stack, b_stack, p_p, wlin_p, blin_p,
                        *, tm, num_classes):
    n_layers = w_stack.shape[0]
    n_pad, f_pad = x_p.shape
    b_pad = p_p.shape[0]
    c_pad = wlin_p.shape[1]
    n_tiles = n_pad // tm

    flops = int(n_layers * (2 * n_pad * n_pad * f_pad + 2 * n_pad * f_pad * f_pad)
                + 2 * b_pad * n_pad * f_pad + 2 * b_pad * f_pad * c_pad)
    # A_hat and P are streamed once per layer; everything else is read once.
    bytes_accessed = int(n_layers * (a_hat_p.size + p_p.size) * 2
                         + x_p.size * 2 + w_stack.size * 2 + b_stack.size * 4
                         + wlin_p.size * 2 + blin_p.size * 4 + b_pad * c_pad * 4)

    # VMEM footprint: ping-pong H scratch + pooled acc + double-buffered streams + residents.
    scratch_bytes = 2 * n_pad * f_pad * 2 + b_pad * f_pad * 4
    stream_bytes = 2 * tm * n_pad * 2 + 2 * b_pad * tm * 2
    resident_bytes = (2 * (f_pad * f_pad * 2 + f_pad * 4)
                      + 2 * (f_pad * c_pad * 2 + c_pad * 4)
                      + 2 * b_pad * c_pad * 4)
    need = scratch_bytes + stream_bytes + resident_bytes
    vmem_limit = int(min(max(2 * need + (8 << 20), 32 << 20), 120 << 20))

    kernel = _make_fused_kernel(tm, num_classes, n_layers, n_tiles)
    return pl.pallas_call(
        kernel,
        out_shape=jax.ShapeDtypeStruct((b_pad, c_pad), jnp.float32),
        grid=(n_layers, n_tiles),
        in_specs=[
            pl.BlockSpec((tm, n_pad), lambda l, i: (i, 0)),              # A_hat row tiles (streamed)
            pl.BlockSpec(memory_space=pl.ANY),                           # X stays in HBM; copied once
            pl.BlockSpec((None, f_pad, f_pad), lambda l, i: (l, 0, 0)),  # folded W' per layer
            pl.BlockSpec((None, 1, f_pad), lambda l, i: (l, 0, 0)),      # folded b' per layer
            pl.BlockSpec((b_pad, tm), lambda l, i: (0, i)),              # mean-pool column tiles
            pl.BlockSpec((f_pad, c_pad), lambda l, i: (0, 0)),           # classifier W (padded)
            pl.BlockSpec((1, c_pad), lambda l, i: (0, 0)),               # classifier b (padded)
        ],
        out_specs=pl.BlockSpec((b_pad, c_pad), lambda l, i: (0, 0)),
        scratch_shapes=[
            pltpu.VMEM((n_pad, f_pad), jnp.bfloat16),   # H ping
            pltpu.VMEM((n_pad, f_pad), jnp.bfloat16),   # H pong
            pltpu.VMEM((b_pad, f_pad), jnp.float32),    # pooled accumulator
            pltpu.SemaphoreType.DMA(()),                # X HBM->VMEM copy semaphore
        ],
        compiler_params=pltpu.CompilerParams(
            # Layer axis must be sequential; row-tile axis is sequential because H ping-pong
            # scratch is shared across tiles of a layer.
            dimension_semantics=("arbitrary", "arbitrary"),
            vmem_limit_bytes=vmem_limit),
        cost_estimate=pl.CostEstimate(flops=flops,
                                      transcendentals=int(b_pad * c_pad),
                                      bytes_accessed=bytes_accessed),
    )(a_hat_p, x_p, w_stack, b_stack, p_p, wlin_p, blin_p)


# ---------------------------------------------------------------------------
# Glue: graph preprocessing, BN folding, padding (plain JAX, runs once)
# ---------------------------------------------------------------------------
def build_normalized_adjacency(edge_index, num_nodes):
    src, dst = edge_index[0], edge_index[1]
    a = jnp.zeros((num_nodes, num_nodes), jnp.float32).at[src, dst].set(1.0)
    a = a + jnp.eye(num_nodes, dtype=jnp.float32)            # add self loops
    deg = jnp.sum(a, axis=1)
    d_inv_sqrt = jax.lax.rsqrt(jnp.maximum(deg, 1e-12))
    return a * d_inv_sqrt[:, None] * d_inv_sqrt[None, :]      # D^-1/2 (A+I) D^-1/2


def build_mean_pool_matrix(batch, num_graphs):
    onehot = (batch[None, :] == jnp.arange(num_graphs)[:, None]).astype(jnp.float32)
    counts = jnp.maximum(jnp.sum(onehot, axis=1, keepdims=True), 1.0)
    return onehot / counts


def fold_batchnorm(w, b, gamma, beta, mean, var, eps=EPS):
    # relu(bn(A X W + b)) == relu(A X W' + b') with:
    scale = gamma * jax.lax.rsqrt(var + eps)                  # (Fout,)
    return w * scale[None, :], (b - mean) * scale + beta


def init_params(key, input_feature, layer_feats):
    params = []
    f_in = input_feature
    for f_out in layer_feats:
        key, k1, k2, k3, k4, k5, k6 = jax.random.split(key, 7)
        params.append(dict(
            w=jax.random.normal(k1, (f_in, f_out), jnp.float32) * 0.1,
            b=jax.random.normal(k2, (f_out,), jnp.float32) * 0.01,
            gamma=1.0 + 0.1 * jax.random.normal(k3, (f_out,), jnp.float32),
            beta=0.05 * jax.random.normal(k4, (f_out,), jnp.float32),
            mean=0.05 * jax.random.normal(k5, (f_out,), jnp.float32),
            var=1.0 + 0.1 * jnp.abs(jax.random.normal(k6, (f_out,), jnp.float32)),
        ))
        f_in = f_out
    key, k1, k2 = jax.random.split(key, 3)
    lin = dict(w=jax.random.normal(k1, (f_in, 2), jnp.float32) * 0.1,
               b=jax.random.normal(k2, (2,), jnp.float32) * 0.01)
    return params, lin


def graphnet_forward(x, edge_index, batch, params, lin, num_graphs, *, tm=128):
    # tm multiple of 128 keeps n_pad lane-dense (A/P lane dims, A@H contraction) and H stores aligned.
    assert tm % LANE == 0, "tm must be a multiple of 128"
    n, f_in = x.shape
    num_classes = lin["w"].shape[1]

    f_pad = _round_up(max([f_in] + [p["w"].shape[1] for p in params]), LANE)
    c_pad = _round_up(num_classes, LANE)
    n_pad = _round_up(n, tm)            # tm | n_pad and 128 | n_pad
    b_pad = _round_up(num_graphs, 8)

    a_hat = build_normalized_adjacency(edge_index, n)
    p = build_mean_pool_matrix(batch, num_graphs)

    # zero-pad + bf16 cast (padded rows/cols contribute nothing: zero A cols / zero P cols)
    a_hat_p = jnp.zeros((n_pad, n_pad), jnp.float32).at[:n, :n].set(a_hat).astype(jnp.bfloat16)
    x_p = jnp.zeros((n_pad, f_pad), jnp.float32).at[:n, :f_in].set(x).astype(jnp.bfloat16)
    p_p = jnp.zeros((b_pad, n_pad), jnp.float32).at[:num_graphs, :n].set(p).astype(jnp.bfloat16)

    w_blocks, b_blocks = [], []
    for layer in params:
        w_f, b_f = fold_batchnorm(layer["w"], layer["b"], layer["gamma"],
                                  layer["beta"], layer["mean"], layer["var"])
        fi, fo = w_f.shape
        w_blocks.append(jnp.zeros((f_pad, f_pad), jnp.float32).at[:fi, :fo].set(w_f))
        b_blocks.append(jnp.zeros((1, f_pad), jnp.float32).at[0, :fo].set(b_f))
    w_stack = jnp.stack(w_blocks).astype(jnp.bfloat16)            # (L, F_pad, F_pad) bf16
    b_stack = jnp.stack(b_blocks)                                 # (L, 1, F_pad)    f32

    f_last = params[-1]["w"].shape[1]
    wlin_p = (jnp.zeros((f_pad, c_pad), jnp.float32)
              .at[:f_last, :num_classes].set(lin["w"]).astype(jnp.bfloat16))
    blin_p = jnp.zeros((1, c_pad), jnp.float32).at[0, :num_classes].set(lin["b"])

    out_pad = fused_graphnet_call(a_hat_p, x_p, w_stack, b_stack, p_p, wlin_p, blin_p,
                                  tm=tm, num_classes=num_classes)
    return out_pad[:num_graphs, :num_classes]


def reference_forward(x, edge_index, batch, params, lin, num_graphs):
    a_hat = build_normalized_adjacency(edge_index, x.shape[0])
    p = build_mean_pool_matrix(batch, num_graphs)
    h = x
    for layer in params:
        h = a_hat @ h @ layer["w"] + layer["b"]
        h = (h - layer["mean"]) * jax.lax.rsqrt(layer["var"] + EPS) * layer["gamma"] + layer["beta"]
        h = jnp.maximum(h, 0.0)
    logits = (p @ h) @ lin["w"] + lin["b"]
    return jax.nn.log_softmax(logits, axis=1)


# ---------------------------------------------------------------------------
if __name__ == "__main__":
    key = jax.random.PRNGKey(0)

    input_feature = 16
    layer_feats = [32, 32]          # out_feature of each GNN layer
    nodes_per_graph = 8
    num_graphs = 2
    num_nodes = nodes_per_graph * num_graphs

    key, kx = jax.random.split(key)
    x = jax.random.normal(kx, (num_nodes, input_feature), jnp.float32)

    # Deterministic bidirectional ring graph inside each of the two graphs
    srcs, dsts = [], []
    for g in range(num_graphs):
        base = g * nodes_per_graph
        for i in range(nodes_per_graph):
            j = (i + 1) % nodes_per_graph
            srcs += [base + i, base + j]
            dsts += [base + j, base + i]
    edge_index = jnp.array([srcs, dsts], dtype=jnp.int32)   # (2, E)

    batch = jnp.repeat(jnp.arange(num_graphs, dtype=jnp.int32), nodes_per_graph)

    params, lin = init_params(key, input_feature, layer_feats)

    out = graphnet_forward(x, edge_index, batch, params, lin, num_graphs, tm=128)
    out = jax.block_until_ready(out)
    assert out.shape == (num_graphs, 2)

    ref = reference_forward(x, edge_index, batch, params, lin, num_graphs)
    assert float(jnp.max(jnp.abs(out - ref))) < 5e-2, (out, ref)
    print("KERNEL_OK")
</pallas_src>

<mosaic_0001>
module attributes {stable_mosaic.version = 11 : i64} {
  func.func @kernel(%arg0: i32, %arg1: i32, %arg2: memref<128x128xbf16, #tpu.memory_space<vmem>>, %arg3: memref<128x128xbf16, #tpu.memory_space<any>>, %arg4: memref<1x128x128xbf16, #tpu.memory_space<vmem>>, %arg5: memref<1x1x128xf32, #tpu.memory_space<vmem>>, %arg6: memref<8x128xbf16, #tpu.memory_space<vmem>>, %arg7: memref<128x128xbf16, #tpu.memory_space<vmem>>, %arg8: memref<1x128xf32, #tpu.memory_space<vmem>>, %arg9: memref<8x128xf32, #tpu.memory_space<vmem>>, %arg10: memref<128x128xbf16, #tpu.memory_space<vmem>>, %arg11: memref<128x128xbf16, #tpu.memory_space<vmem>>, %arg12: memref<8x128xf32, #tpu.memory_space<vmem>>, %arg13: memref<!tpu.dma_semaphore, #tpu.memory_space<semaphore_mem>>) attributes {dimension_semantics = [#tpu.dimension_semantics<arbitrary>, #tpu.dimension_semantics<arbitrary>], iteration_bounds = array<i64: 2, 1>, scalar_prefetch = 0 : i64, scratch_operands = 4 : i64, tpu.core_type = #tpu.core_type<tc>, window_params = [{transform_indices = @transform_0, window_bounds = array<i64: 128, 128>}, {}, {transform_indices = @transform_2, window_bounds = array<i64: 1, 128, 128>}, {transform_indices = @transform_3, window_bounds = array<i64: 1, 1, 128>}, {transform_indices = @transform_4, window_bounds = array<i64: 8, 128>}, {pipeline_mode = #tpu.pipeline_mode<synchronous>, transform_indices = @transform_5, window_bounds = array<i64: 128, 128>}, {pipeline_mode = #tpu.pipeline_mode<synchronous>, transform_indices = @transform_6, window_bounds = array<i64: 1, 128>}, {pipeline_mode = #tpu.pipeline_mode<synchronous>, transform_indices = @transform_7, window_bounds = array<i64: 8, 128>}]} {
    %c1_i32 = arith.constant 1 : i32
    %0 = arith.cmpi eq, %arg0, %c1_i32 : i32
    %c0_i32 = arith.constant 0 : i32
    %1 = arith.cmpi eq, %arg0, %c0_i32 : i32
    %c0_i32_0 = arith.constant 0 : i32
    %2 = arith.cmpi eq, %arg1, %c0_i32_0 : i32
    %3 = arith.andi %1, %2 : i1
    %4 = arith.extui %3 : i1 to i32
    %c0_i32_1 = arith.constant 0 : i32
    %5 = arith.cmpi ne, %4, %c0_i32_1 : i32
    scf.if %5 {
      tpu.enqueue_dma source(%arg3 : memref<128x128xbf16, #tpu.memory_space<any>>) target(%arg10 : memref<128x128xbf16, #tpu.memory_space<vmem>>) target_semaphore(%arg13 : memref<!tpu.dma_semaphore, #tpu.memory_space<semaphore_mem>>)
      tpu.wait_dma2 semaphore(%arg13 : memref<!tpu.dma_semaphore, #tpu.memory_space<semaphore_mem>>) src(%arg3 : memref<128x128xbf16, #tpu.memory_space<any>>) dst(%arg10 : memref<128x128xbf16, #tpu.memory_space<vmem>>)
    } else {
    }
    %c0_i32_2 = arith.constant 0 : i32
    %6 = arith.cmpi eq, %arg1, %c0_i32_2 : i32
    %7 = arith.andi %0, %6 : i1
    %8 = arith.extui %7 : i1 to i32
    %c0_i32_3 = arith.constant 0 : i32
    %9 = arith.cmpi ne, %8, %c0_i32_3 : i32
    scf.if %9 {
      %cst = arith.constant 0.000000e+00 : f32
      %42 = vector.broadcast %cst : f32 to vector<8x128xf32>
      %c0 = arith.constant 0 : index
      %c0_21 = arith.constant 0 : index
      %43 = vector.load %arg12[%c0, %c0_21] : memref<8x128xf32, #tpu.memory_space<vmem>>, vector<8x128xf32>
      tpu.vector_store %arg12[%c0, %c0_21], %42 {strides = array<i32>} : memref<8x128xf32, #tpu.memory_space<vmem>>, vector<8x128xf32>,
    } else {
    }
    %c128_i32 = arith.constant 128 : i32
    %10 = arith.muli %arg1, %c128_i32 : i32
    %11 = tpu.assume_multiple %10, 128 : i32
    %c2_i32 = arith.constant 2 : i32
    %c0_i32_4 = arith.constant 0 : i32
    %12 = arith.cmpi eq, %c2_i32, %c0_i32_4 : i32
    %c1_i32_5 = arith.constant 1 : i32
    %13 = arith.select %12, %c1_i32_5, %c2_i32 : i32
    %14 = arith.remsi %arg0, %13 : i32
    %c0_i32_6 = arith.constant 0 : i32
    %15 = arith.cmpi ne, %14, %c0_i32_6 : i32
    %c0_i32_7 = arith.constant 0 : i32
    %16 = arith.cmpi slt, %14, %c0_i32_7 : i32
    %c0_i32_8 = arith.constant 0 : i32
    %17 = arith.cmpi slt, %13, %c0_i32_8 : i32
    %18 = arith.xori %16, %17 : i1
    %19 = arith.andi %18, %15 : i1
    %20 = arith.addi %14, %13 : i32
    %21 = arith.select %19, %20, %14 : i32
    %c0_i32_9 = arith.constant 0 : i32
    %22 = arith.cmpi eq, %21, %c0_i32_9 : i32
    %23 = arith.extui %22 : i1 to i32
    %c0_i32_10 = arith.constant 0 : i32
    %24 = arith.cmpi ne, %23, %c0_i32_10 : i32
    scf.if %24 {
      %c0 = arith.constant 0 : index
      %c0_21 = arith.constant 0 : index
      %42 = vector.load %arg2[%c0, %c0_21] : memref<128x128xbf16, #tpu.memory_space<vmem>>, vector<128x128xbf16>
      %c0_22 = arith.constant 0 : index
      %c0_23 = arith.constant 0 : index
      %43 = vector.load %arg10[%c0_22, %c0_23] : memref<128x128xbf16, #tpu.memory_space<vmem>>, vector<128x128xbf16>
      %cst = arith.constant dense<0.000000e+00> : vector<128x128xf32>
      %44 = tpu.matmul %42, %43, %cst {dimension_numbers = #tpu.dot_dimension_numbers<[1], [0], [0], [1], [0, 0, 1, 1], [], []>} : vector<128x128xbf16>, vector<128x128xbf16>, vector<128x128xf32> -> vector<128x128xf32>
      %45 = arith.truncf %44 : vector<128x128xf32> to vector<128x128xbf16>
      %c0_24 = arith.constant 0 : index
      %c0_25 = arith.constant 0 : index
      %c0_26 = arith.constant 0 : index
      %46 = vector.load %arg4[%c0_24, %c0_25, %c0_26] : memref<1x128x128xbf16, #tpu.memory_space<vmem>>, vector<1x128x128xbf16>
      %47 = vector.shape_cast %46 : vector<1x128x128xbf16> to vector<128x128xbf16>
      %cst_27 = arith.constant dense<0.000000e+00> : vector<128x128xf32>
      %48 = tpu.matmul %45, %47, %cst_27 {dimension_numbers = #tpu.dot_dimension_numbers<[1], [0], [0], [1], [0, 0, 1, 1], [], []>} : vector<128x128xbf16>, vector<128x128xbf16>, vector<128x128xf32> -> vector<128x128xf32>
      %c0_28 = arith.constant 0 : index
      %c0_29 = arith.constant 0 : index
      %c0_30 = arith.constant 0 : index
      %49 = vector.load %arg5[%c0_28, %c0_29, %c0_30] : memref<1x1x128xf32, #tpu.memory_space<vmem>>, vector<1x1x128xf32>
      %50 = vector.shape_cast %49 : vector<1x1x128xf32> to vector<1x128xf32>
      %51 = vector.broadcast %50 : vector<1x128xf32> to vector<128x128xf32>
      %52 = arith.addf %48, %51 : vector<128x128xf32>
      %cst_31 = arith.constant 0.000000e+00 : f32
      %53 = vector.broadcast %cst_31 : f32 to vector<128x128xf32>
      %54 = arith.maximumf %52, %53 : vector<128x128xf32>
      %55 = arith.truncf %54 : vector<128x128xf32> to vector<128x128xbf16>
      %56 = arith.index_cast %11 : i32 to index
      %c0_32 = arith.constant 0 : index
      %57 = vector.load %arg11[%56, %c0_32] : memref<128x128xbf16, #tpu.memory_space<vmem>>, vector<128x128xbf16>
      tpu.vector_store %arg11[%56, %c0_32], %55 {strides = array<i32>} : memref<128x128xbf16, #tpu.memory_space<vmem>>, vector<128x128xbf16>,
      %58 = arith.extui %0 : i1 to i32
      %c0_i32_33 = arith.constant 0 : i32
      %59 = arith.cmpi ne, %58, %c0_i32_33 : i32
      scf.if %59 {
        %c0_34 = arith.constant 0 : index
        %c0_35 = arith.constant 0 : index
        %60 = vector.load %arg12[%c0_34, %c0_35] : memref<8x128xf32, #tpu.memory_space<vmem>>, vector<8x128xf32>
        %c0_36 = arith.constant 0 : index
        %c0_37 = arith.constant 0 : index
        %61 = vector.load %arg6[%c0_36, %c0_37] : memref<8x128xbf16, #tpu.memory_space<vmem>>, vector<8x128xbf16>
        %cst_38 = arith.constant dense<0.000000e+00> : vector<8x128xf32>
        %62 = tpu.matmul %61, %55, %cst_38 {dimension_numbers = #tpu.dot_dimension_numbers<[1], [0], [0], [1], [0, 0, 1, 1], [], []>} : vector<8x128xbf16>, vector<128x128xbf16>, vector<8x128xf32> -> vector<8x128xf32>
        %63 = arith.addf %60, %62 : vector<8x128xf32>
        %c0_39 = arith.constant 0 : index
        %c0_40 = arith.constant 0 : index
        %64 = vector.load %arg12[%c0_39, %c0_40] : memref<8x128xf32, #tpu.memory_space<vmem>>, vector<8x128xf32>
        tpu.vector_store %arg12[%c0_39, %c0_40], %63 {strides = array<i32>} : memref<8x128xf32, #tpu.memory_space<vmem>>, vector<8x128xf32>,
      } else {
      }
    } else {
    }
    %c2_i32_11 = arith.constant 2 : i32
    %c0_i32_12 = arith.constant 0 : i32
    %25 = arith.cmpi eq, %c2_i32_11, %c0_i32_12 : i32
    %c1_i32_13 = arith.constant 1 : i32
    %26 = arith.select %25, %c1_i32_13, %c2_i32_11 : i32
    %27 = arith.remsi %arg0, %26 : i32
    %c0_i32_14 = arith.constant 0 : i32
    %28 = arith.cmpi ne, %27, %c0_i32_14 : i32
    %c0_i32_15 = arith.constant 0 : i32
    %29 = arith.cmpi slt, %27, %c0_i32_15 : i32
    %c0_i32_16 = arith.constant 0 : i32
    %30 = arith.cmpi slt, %26, %c0_i32_16 : i32
    %31 = arith.xori %29, %30 : i1
    %32 = arith.andi %31, %28 : i1
    %33 = arith.addi %27, %26 : i32
    %34 = arith.select %32, %33, %27 : i32
    %c1_i32_17 = arith.constant 1 : i32
    %35 = arith.cmpi eq, %34, %c1_i32_17 : i32
    %36 = arith.extui %35 : i1 to i32
    %c0_i32_18 = arith.constant 0 : i32
    %37 = arith.cmpi ne, %36, %c0_i32_18 : i32
    scf.if %37 {
      %c0 = arith.constant 0 : index
      %c0_21 = arith.constant 0 : index
      %42 = vector.load %arg2[%c0, %c0_21] : memref<128x128xbf16, #tpu.memory_space<vmem>>, vector<128x128xbf16>
      %c0_22 = arith.constant 0 : index
      %c0_23 = arith.constant 0 : index
      %43 = vector.load %arg11[%c0_22, %c0_23] : memref<128x128xbf16, #tpu.memory_space<vmem>>, vector<128x128xbf16>
      %cst = arith.constant dense<0.000000e+00> : vector<128x128xf32>
      %44 = tpu.matmul %42, %43, %cst {dimension_numbers = #tpu.dot_dimension_numbers<[1], [0], [0], [1], [0, 0, 1, 1], [], []>} : vector<128x128xbf16>, vector<128x128xbf16>, vector<128x128xf32> -> vector<128x128xf32>
      %45 = arith.truncf %44 : vector<128x128xf32> to vector<128x128xbf16>
      %c0_24 = arith.constant 0 : index
      %c0_25 = arith.constant 0 : index
      %c0_26 = arith.constant 0 : index
      %46 = vector.load %arg4[%c0_24, %c0_25, %c0_26] : memref<1x128x128xbf16, #tpu.memory_space<vmem>>, vector<1x128x128xbf16>
      %47 = vector.shape_cast %46 : vector<1x128x128xbf16> to vector<128x128xbf16>
      %cst_27 = arith.constant dense<0.000000e+00> : vector<128x128xf32>
      %48 = tpu.matmul %45, %47, %cst_27 {dimension_numbers = #tpu.dot_dimension_numbers<[1], [0], [0], [1], [0, 0, 1, 1], [], []>} : vector<128x128xbf16>, vector<128x128xbf16>, vector<128x128xf32> -> vector<128x128xf32>
      %c0_28 = arith.constant 0 : index
      %c0_29 = arith.constant 0 : index
      %c0_30 = arith.constant 0 : index
      %49 = vector.load %arg5[%c0_28, %c0_29, %c0_30] : memref<1x1x128xf32, #tpu.memory_space<vmem>>, vector<1x1x128xf32>
      %50 = vector.shape_cast %49 : vector<1x1x128xf32> to vector<1x128xf32>
      %51 = vector.broadcast %50 : vector<1x128xf32> to vector<128x128xf32>
      %52 = arith.addf %48, %51 : vector<128x128xf32>
      %cst_31 = arith.constant 0.000000e+00 : f32
      %53 = vector.broadcast %cst_31 : f32 to vector<128x128xf32>
      %54 = arith.maximumf %52, %53 : vector<128x128xf32>
      %55 = arith.truncf %54 : vector<128x128xf32> to vector<128x128xbf16>
      %56 = arith.index_cast %11 : i32 to index
      %c0_32 = arith.constant 0 : index
      %57 = vector.load %arg10[%56, %c0_32] : memref<128x128xbf16, #tpu.memory_space<vmem>>, vector<128x128xbf16>
      tpu.vector_store %arg10[%56, %c0_32], %55 {strides = array<i32>} : memref<128x128xbf16, #tpu.memory_space<vmem>>, vector<128x128xbf16>,
      %58 = arith.extui %0 : i1 to i32
      %c0_i32_33 = arith.constant 0 : i32
      %59 = arith.cmpi ne, %58, %c0_i32_33 : i32
      scf.if %59 {
        %c0_34 = arith.constant 0 : index
        %c0_35 = arith.constant 0 : index
        %60 = vector.load %arg12[%c0_34, %c0_35] : memref<8x128xf32, #tpu.memory_space<vmem>>, vector<8x128xf32>
        %c0_36 = arith.constant 0 : index
        %c0_37 = arith.constant 0 : index
        %61 = vector.load %arg6[%c0_36, %c0_37] : memref<8x128xbf16, #tpu.memory_space<vmem>>, vector<8x128xbf16>
        %cst_38 = arith.constant dense<0.000000e+00> : vector<8x128xf32>
        %62 = tpu.matmul %61, %55, %cst_38 {dimension_numbers = #tpu.dot_dimension_numbers<[1], [0], [0], [1], [0, 0, 1, 1], [], []>} : vector<8x128xbf16>, vector<128x128xbf16>, vector<8x128xf32> -> vector<8x128xf32>
        %63 = arith.addf %60, %62 : vector<8x128xf32>
        %c0_39 = arith.constant 0 : index
        %c0_40 = arith.constant 0 : index
        %64 = vector.load %arg12[%c0_39, %c0_40] : memref<8x128xf32, #tpu.memory_space<vmem>>, vector<8x128xf32>
        tpu.vector_store %arg12[%c0_39, %c0_40], %63 {strides = array<i32>} : memref<8x128xf32, #tpu.memory_space<vmem>>, vector<8x128xf32>,
      } else {
      }
    } else {
    }
    %c0_i32_19 = arith.constant 0 : i32
    %38 = arith.cmpi eq, %arg1, %c0_i32_19 : i32
    %39 = arith.andi %0, %38 : i1
    %40 = arith.extui %39 : i1 to i32
    %c0_i32_20 = arith.constant 0 : i32
    %41 = arith.cmpi ne, %40, %c0_i32_20 : i32
    scf.if %41 {
      %c0 = arith.constant 0 : index
      %c0_21 = arith.constant 0 : index
      %42 = vector.load %arg12[%c0, %c0_21] : memref<8x128xf32, #tpu.memory_space<vmem>>, vector<8x128xf32>
      %43 = arith.truncf %42 : vector<8x128xf32> to vector<8x128xbf16>
      %c0_22 = arith.constant 0 : index
      %c0_23 = arith.constant 0 : index
      %44 = vector.load %arg7[%c0_22, %c0_23] : memref<128x128xbf16, #tpu.memory_space<vmem>>, vector<128x128xbf16>
      %cst = arith.constant dense<0.000000e+00> : vector<8x128xf32>
      %45 = tpu.matmul %43, %44, %cst {dimension_numbers = #tpu.dot_dimension_numbers<[1], [0], [0], [1], [0, 0, 1, 1], [], []>} : vector<8x128xbf16>, vector<128x128xbf16>, vector<8x128xf32> -> vector<8x128xf32>
      %c0_24 = arith.constant 0 : index
      %c0_25 = arith.constant 0 : index
      %46 = vector.load %arg8[%c0_24, %c0_25] : memref<1x128xf32, #tpu.memory_space<vmem>>, vector<1x128xf32>
      %47 = vector.broadcast %46 : vector<1x128xf32> to vector<8x128xf32>
      %48 = arith.addf %45, %47 : vector<8x128xf32>
      %49 = tpu.iota {dimensions = array<i32: 1>} : vector<8x128xi32>
      %c2_i32_26 = arith.constant 2 : i32
      %50 = vector.broadcast %c2_i32_26 : i32 to vector<8x128xi32>
      %51 = arith.cmpi slt, %49, %50 : vector<8x128xi32>
      %cst_27 = arith.constant -3.40282347E+38 : f32
      %52 = vector.broadcast %cst_27 : f32 to vector<8x128xf32>
      %53 = arith.select %51, %48, %52 : vector<8x128xi1>, vector<8x128xf32>
      %cst_28 = arith.constant dense<0xFF800000> : vector<8xf32>
      %54 = vector.multi_reduction <maximumf>, %53, %cst_28 [1] : vector<8x128xf32> to vector<8xf32>
      %55 = vector.shape_cast %54 : vector<8xf32> to vector<8x1xf32>
      %56 = vector.broadcast %55 : vector<8x1xf32> to vector<8x128xf32>
      %57 = arith.subf %53, %56 : vector<8x128xf32>
      %58 = math.exp %57 : vector<8x128xf32>
      %cst_29 = arith.constant 0.000000e+00 : f32
      %59 = vector.broadcast %cst_29 : f32 to vector<8x128xf32>
      %60 = arith.select %51, %58, %59 : vector<8x128xi1>, vector<8x128xf32>
      %cst_30 = arith.constant dense<0.000000e+00> : vector<8xf32>
      %61 = vector.multi_reduction <add>, %60, %cst_30 [1] : vector<8x128xf32> to vector<8xf32>
      %62 = vector.shape_cast %61 : vector<8xf32> to vector<8x1xf32>
      %63 = math.log %62 : vector<8x1xf32>
      %64 = vector.broadcast %63 : vector<8x1xf32> to vector<8x128xf32>
      %65 = arith.subf %57, %64 : vector<8x128xf32>
      %c0_31 = arith.constant 0 : index
      %c0_32 = arith.constant 0 : index
      %66 = vector.load %arg9[%c0_31, %c0_32] : memref<8x128xf32, #tpu.memory_space<vmem>>, vector<8x128xf32>
      tpu.vector_store %arg9[%c0_31, %c0_32], %65 {strides = array<i32>} : memref<8x128xf32, #tpu.memory_space<vmem>>, vector<8x128xf32>,
    } else {
    }
    return
  }
  func.func @transform_0(%arg0: i32, %arg1: i32) -> (i32, i32) {
    %c0_i32 = arith.constant 0 : i32
    %c0_i32_0 = arith.constant 0 : i32
    return %arg1, %c0_i32 : i32, i32
  }
  func.func @transform_2(%arg0: i32, %arg1: i32) -> (i32, i32, i32) {
    %c0_i32 = arith.constant 0 : i32
    %c0_i32_0 = arith.constant 0 : i32
    %c0_i32_1 = arith.constant 0 : i32
    return %arg0, %c0_i32, %c0_i32_0 : i32, i32, i32
  }
  func.func @transform_3(%arg0: i32, %arg1: i32) -> (i32, i32, i32) {
    %c0_i32 = arith.constant 0 : i32
    %c0_i32_0 = arith.constant 0 : i32
    %c0_i32_1 = arith.constant 0 : i32
    return %arg0, %c0_i32, %c0_i32_0 : i32, i32, i32
  }
  func.func @transform_4(%arg0: i32, %arg1: i32) -> (i32, i32) {
    %c0_i32 = arith.constant 0 : i32
    %c0_i32_0 = arith.constant 0 : i32
    return %c0_i32, %arg1 : i32, i32
  }
  func.func @transform_5(%arg0: i32, %arg1: i32) -> (i32, i32) {
    %c0_i32 = arith.constant 0 : i32
    %c0_i32_0 = arith.constant 0 : i32
    %c0_i32_1 = arith.constant 0 : i32
    return %c0_i32, %c0_i32_0 : i32, i32
  }
  func.func @transform_6(%arg0: i32, %arg1: i32) -> (i32, i32) {
    %c0_i32 = arith.constant 0 : i32
    %c0_i32_0 = arith.constant 0 : i32
    %c0_i32_1 = arith.constant 0 : i32
    return %c0_i32, %c0_i32_0 : i32, i32
  }
  func.func @transform_7(%arg0: i32, %arg1: i32) -> (i32, i32) {
    %c0_i32 = arith.constant 0 : i32
    %c0_i32_0 = arith.constant 0 : i32
    %c0_i32_1 = arith.constant 0 : i32
    return %c0_i32, %c0_i32_0 : i32, i32
  }
}

</mosaic_0001>

<llo_original>
// kernel: tpu_custom_call.1
$region0: #{tpu_custom_call.1}
  #allocation0 [shape = 'u32[]', space=smem, size = 0x4, offset = 0x4, fixed_abs, tag = 'smem constant byte address 0x4 - core index']
  #allocation1 [shape = 'u32[144,128]{1,0:T(1,128)}', space=vmem, size = 0x12000, scoped, tag = 'internal scratch']
  #allocation2 [shape = 'bf16[128,128]{1,0:T(16,128)(2,1)}', space=vmem, size = 0x8000, scoped, tag = 'scratch operand']
  #allocation3 [shape = 'bf16[128,128]{1,0:T(16,128)(2,1)}', space=vmem, size = 0x8000, scoped, tag = 'scratch operand']
  #allocation4 [shape = 'f32[8,128]{1,0:T(8,128)}', space=vmem, size = 0x1000, scoped, tag = 'scratch operand']
  #allocation5 [shape = 's32[1]{0}', space=sflag, size = 0x4, scoped, tag = 'scratch operand']
  #allocation13 [shape = 's32[]', space=sflag, size = 0x4, offset = 0, fixed_abs, tag = 'sflag constant byte address 0x0 - dummy sync flag']
  #allocation14 [shape = 's32[]', space=sflag, size = 0x4, offset = 0, fixed_abs, tag = 'sflag constant byte address 0x0 - dummy sync flag']
  #allocation15 [shape = 'u32[]', space=smem, size = 0x4, offset = 0x44, fixed_abs, tag = 'smem constant byte address 0x44 - assertion arg 0']
  #allocation16 [shape = 'u32[]', space=smem, size = 0x4, offset = 0x48, fixed_abs, tag = 'smem constant byte address 0x48 - assertion arg 1']
  %s0 = inlined_call_operand.hbm [shape: bf16[128,128], index: 0, kind: input, shape index: {}]
  %s1 = inlined_call_operand.hbm [shape: bf16[128,128], index: 1, kind: input, shape index: {}]
  %s2 = inlined_call_operand.hbm [shape: bf16[2,128,128], index: 2, kind: input, shape index: {}]
  %s3 = inlined_call_operand.vmem [shape: f32[2,1,128], index: 3, kind: input, shape index: {}]
  %s4 = inlined_call_operand.vmem [shape: bf16[8,128], index: 4, kind: input, shape index: {}]
  %s5 = inlined_call_operand.hbm [shape: bf16[128,128], index: 5, kind: input, shape index: {}]
  %s6 = inlined_call_operand.vmem [shape: f32[1,128], index: 6, kind: input, shape index: {}]
  %s7 = inlined_call_operand.hbm [shape: f32[8,128], index: 7, kind: output, shape index: {}]
  %s8 = sld [smem:[#allocation0]]
  $region101: #{tpu_custom_call.1} parent=0
    _
  %s10 = ssub.s32 1, %s8
  %s11 = scalar_select 0, %s10, %s8
  $region1: #{tpu_custom_call.1} parent=0
    #allocation6 [shape = 'u8[32768]{0}', space=vmem, size = 0x8000, scoped, tag = 'input window, operand 0, single buffered']
    #allocation7 [shape = 's32[2]{0}', space=sflag, size = 0x8, scoped, tag = 'scoped memory for tpu_custom_call.1']
    #allocation8 [shape = 's32[2]{0}', space=sflag, size = 0x8, scoped, tag = 'scoped memory for tpu_custom_call.1']
    #allocation9 [shape = 'u8[65536]{0}', space=vmem, size = 0x10000, scoped, tag = 'input window, operand 2']
    #allocation10 [shape = 's32[2]{0}', space=sflag, size = 0x8, scoped, tag = 'scoped memory for tpu_custom_call.1']
    #allocation11 [shape = 'u8[32768]{0}', space=vmem, size = 0x8000, scoped, tag = 'input window, operand 5, single buffered']
    #allocation12 [shape = 'u8[4096]{0}', space=vmem, size = 0x1000, scoped, tag = 'output window, operand 0, single buffered']
    %12 = vsyncpa [#allocation7], 0
    %13 = vsyncpa [#allocation10], 0
    %s14 = scalar_lea.sflag [#allocation10], 1
    %15 = vsyncpa %s14, 0
    %16 = vsyncpa [#allocation8], 0
    loop: start=0, step=1, limit=4
    $region2: #{tpu_custom_call.1} parent=1 // loop_pre_header
      _
    $region3: #{tpu_custom_call.1} parent=1 // loop_header
      %s18 = sphi 0, %s22
      %p19 = scmp.ge.s32.totalorder %s18, 4
      %s25 = sphi 0, %s37
      %s26 = sphi 0, %s33
      %s27 = sphi 0, %s25
      %s28 = sphi 0, %s26
      %s29 = sphi 0, %s27
      %s30 = sphi 0, %s28
      %s40 = sphi 0, %s42
      %s43 = sphi 0, %s40
      %s44 = sphi 0, %s43
      %s60 = sphi 0, %s44
      %s66 = sphi 0, %s68
      %s69 = sphi 0, %s66
      %s70 = sphi 0, %s69
      %s86 = sphi 0, %s70
      %s92 = sphi 0, %s94
      %s95 = sphi 0, %s92
      %s96 = sphi 0, %s95
      %s112 = sphi 0, %s96
      %s118 = sphi 0, %s120
      %s121 = sphi 0, %s118
      %s122 = sphi 0, %s121
      %s138 = sphi 0, %s122
      %s142 = sphi 0, %s142
      %s144 = sphi 0, %s142
      %s145 = sphi 0, %s144
      %s159 = sphi 0, %s145
      %s163 = sphi 0, %s163
      %s165 = sphi 0, %s163
      %s166 = sphi 0, %s165
      %s180 = sphi 0, %s166
      %s184 = sphi 0, %s184
      %s186 = sphi 0, %s184
      %s187 = sphi 0, %s186
      %s201 = sphi 0, %s187
    $region4: #{tpu_custom_call.1} parent=1 // loop_header_branch
      %21 = sbr.rel (%p19) target = $region8
    $region5: #{tpu_custom_call.1} parent=1 // loop_body
      %s23 = ssub.s32 %s18, 1
      %s24 = ssub.s32 %s18, 2
      %s31 = sadd.s32 1, %s26
      %p32 = scmp.ge.s32.totalorder %s31, 1
      %s33 = scalar_select %p32, 0, %s31
      %s34 = sadd.s32 1, %s25
      %s35 = scalar_select %p32, %s34, %s25
      %p36 = scmp.ge.s32.totalorder %s35, 2
      %s37 = scalar_select %p36, 0, %s35
      %s38 = ssub.s32 %s26, %s33
      %p39 = scmp.eq.s32.totalorder %s38, 0
      %s41 = sadd.s32 %s40, 1
      %s42 = scalar_select %p39, %s40, %s41
      %p45 = pneg %p39
      %p46 = scmp.eq.s32.totalorder %s18, 1
      %p47 = por %p45, %p46
      %p48 = scmp.ne.s32.totalorder %s40, %s43
      %p49 = scmp.eq.s32.totalorder %s18, 0
      %p50 = por %p48, %p49
      %p51 = scmp.ne.s32.totalorder %s40, %s43
      %p52 = scmp.eq.s32.totalorder %s23, 1
      %p53 = por %p51, %p52
      %p54 = scmp.ne.s32.totalorder %s43, %s44
      %p55 = scmp.eq.s32.totalorder %s23, 0
      %p56 = por %p54, %p55
      %p57 = scmp.ne.s32.totalorder %s43, %s44
      %p58 = scmp.eq.s32.totalorder %s24, 1
      %p59 = por %p57, %p58
      %p61 = scmp.ne.s32.totalorder %s44, %s60
      %p62 = scmp.eq.s32.totalorder %s24, 0
      %p63 = por %p61, %p62
      %s64 = ssub.s32 %s25, %s37
      %p65 = scmp.eq.s32.totalorder %s64, 0
      %s67 = sadd.s32 %s66, 1
      %s68 = scalar_select %p65, %s66, %s67
      %p71 = pneg %p65
      %p72 = scmp.eq.s32.totalorder %s18, 1
      %p73 = por %p71, %p72
      %p74 = scmp.ne.s32.totalorder %s66, %s69
      %p75 = scmp.eq.s32.totalorder %s18, 0
      %p76 = por %p74, %p75
      %p77 = scmp.ne.s32.totalorder %s66, %s69
      %p78 = scmp.eq.s32.totalorder %s23, 1
      %p79 = por %p77, %p78
      %p80 = scmp.ne.s32.totalorder %s69, %s70
      %p81 = scmp.eq.s32.totalorder %s23, 0
      %p82 = por %p80, %p81
      %p83 = scmp.ne.s32.totalorder %s69, %s70
      %p84 = scmp.eq.s32.totalorder %s24, 1
      %p85 = por %p83, %p84
      %p87 = scmp.ne.s32.totalorder %s70, %s86
      %p88 = scmp.eq.s32.totalorder %s24, 0
      %p89 = por %p87, %p88
      %s90 = ssub.s32 %s25, %s37
      %p91 = scmp.eq.s32.totalorder %s90, 0
      %s93 = sadd.s32 %s92, 1
      %s94 = scalar_select %p91, %s92, %s93
      %p97 = pneg %p91
      %p98 = scmp.eq.s32.totalorder %s18, 1
      %p99 = por %p97, %p98
      %p100 = scmp.ne.s32.totalorder %s92, %s95
      %p101 = scmp.eq.s32.totalorder %s18, 0
      %p102 = por %p100, %p101
      %p103 = scmp.ne.s32.totalorder %s92, %s95
      %p104 = scmp.eq.s32.totalorder %s23, 1
      %p105 = por %p103, %p104
      %p106 = scmp.ne.s32.totalorder %s95, %s96
      %p107 = scmp.eq.s32.totalorder %s23, 0
      %p108 = por %p106, %p107
      %p109 = scmp.ne.s32.totalorder %s95, %s96
      %p110 = scmp.eq.s32.totalorder %s24, 1
      %p111 = por %p109, %p110
      %p113 = scmp.ne.s32.totalorder %s96, %s112
      %p114 = scmp.eq.s32.totalorder %s24, 0
      %p115 = por %p113, %p114
      %s116 = ssub.s32 %s26, %s33
      %p117 = scmp.eq.s32.totalorder %s116, 0
      %s119 = sadd.s32 %s118, 1
      %s120 = scalar_select %p117, %s118, %s119
      %p123 = pneg %p117
      %p124 = scmp.eq.s32.totalorder %s18, 1
      %p125 = por %p123, %p124
      %p126 = scmp.ne.s32.totalorder %s118, %s121
      %p127 = scmp.eq.s32.totalorder %s18, 0
      %p128 = por %p126, %p127
      %p129 = scmp.ne.s32.totalorder %s118, %s121
      %p130 = scmp.eq.s32.totalorder %s23, 1
      %p131 = por %p129, %p130
      %p132 = scmp.ne.s32.totalorder %s121, %s122
      %p133 = scmp.eq.s32.totalorder %s23, 0
      %p134 = por %p132, %p133
      %p135 = scmp.ne.s32.totalorder %s121, %s122
      %p136 = scmp.eq.s32.totalorder %s24, 1
      %p137 = por %p135, %p136
      %p139 = scmp.ne.s32.totalorder %s122, %s138
      %p140 = scmp.eq.s32.totalorder %s24, 0
      %p141 = por %p139, %p140
      %s143 = sadd.s32 %s142, 1
      %p146 = scmp.eq.s32.totalorder %s18, 1
      %p147 = scmp.ne.s32.totalorder %s142, %s144
      %p148 = scmp.eq.s32.totalorder %s18, 0
      %p149 = por %p147, %p148
      %p150 = scmp.ne.s32.totalorder %s142, %s144
      %p151 = scmp.eq.s32.totalorder %s23, 1
      %p152 = por %p150, %p151
      %p153 = scmp.ne.s32.totalorder %s144, %s145
      %p154 = scmp.eq.s32.totalorder %s23, 0
      %p155 = por %p153, %p154
      %p156 = scmp.ne.s32.totalorder %s144, %s145
      %p157 = scmp.eq.s32.totalorder %s24, 1
      %p158 = por %p156, %p157
      %p160 = scmp.ne.s32.totalorder %s145, %s159
      %p161 = scmp.eq.s32.totalorder %s24, 0
      %p162 = por %p160, %p161
      %s164 = sadd.s32 %s163, 1
      %p167 = scmp.eq.s32.totalorder %s18, 1
      %p168 = scmp.ne.s32.totalorder %s163, %s165
      %p169 = scmp.eq.s32.totalorder %s18, 0
      %p170 = por %p168, %p169
      %p171 = scmp.ne.s32.totalorder %s163, %s165
      %p172 = scmp.eq.s32.totalorder %s23, 1
      %p173 = por %p171, %p172
      %p174 = scmp.ne.s32.totalorder %s165, %s166
      %p175 = scmp.eq.s32.totalorder %s23, 0
      %p176 = por %p174, %p175
      %p177 = scmp.ne.s32.totalorder %s165, %s166
      %p178 = scmp.eq.s32.totalorder %s24, 1
      %p179 = por %p177, %p178
      %p181 = scmp.ne.s32.totalorder %s166, %s180
      %p182 = scmp.eq.s32.totalorder %s24, 0
      %p183 = por %p181, %p182
      %s185 = sadd.s32 %s184, 1
      %p188 = scmp.eq.s32.totalorder %s18, 1
      %p189 = scmp.ne.s32.totalorder %s184, %s186
      %p190 = scmp.eq.s32.totalorder %s18, 0
      %p191 = por %p189, %p190
      %p192 = scmp.ne.s32.totalorder %s184, %s186
      %p193 = scmp.eq.s32.totalorder %s23, 1
      %p194 = por %p192, %p193
      %p195 = scmp.ne.s32.totalorder %s186, %s187
      %p196 = scmp.eq.s32.totalorder %s23, 0
      %p197 = por %p195, %p196
      %p198 = scmp.ne.s32.totalorder %s186, %s187
      %p199 = scmp.eq.s32.totalorder %s24, 1
      %p200 = por %p198, %p199
      %p202 = scmp.ne.s32.totalorder %s187, %s201
      %p203 = scmp.eq.s32.totalorder %s24, 0
      %p204 = por %p202, %p203
      %p205 = scmp.le.s32.totalorder 1, %s18
      %p206 = scmp.lt.s32.totalorder %s18, 3
      %p207 = pnand %p205, %p206
      %p208 = pneg %p207
      // Predicated region
      $region9: #{tpu_custom_call.1} parent=5 // pred_check
        _
      $region10: #{tpu_custom_call.1} parent=5 // pred_check_branch
        %210 = sbr.rel (%p207) target = $region12
      $region11: #{tpu_custom_call.1} parent=5 // pred_region
        %s211 = ssub.s32 %s18, 1
        // Predicated region
        $region13: #{tpu_custom_call.1} parent=11 // pred_check
          %p212 = pneg %p56
        $region14: #{tpu_custom_call.1} parent=11 // pred_check_branch
          %214 = sbr.rel (%p212) target = $region16
        $region15: #{tpu_custom_call.1} parent=11 // pred_region
          %s215 = smul.u32 16, %s28
          %s217 = ssub.s32 1024, 1024
          %218 = vsyncadd [#allocation7], %s217
          %s219 = smul.addr %s215, 64
          %s220 = scalar_lea.hbm %s0, %s219
          %s221 = sshll.u32 [#allocation6], 4
          %s222 = int_to_ptr.vmem [resolvable:$true] %s221
          %227 = dma.hbm_to_vmem [thread:$0]  %s220, 1024, %s222, [#allocation7], 64, 64, 4
        $region16: #{tpu_custom_call.1} parent=11 // pred_fallthru
          _
        // Predicated region
        $region17: #{tpu_custom_call.1} parent=11 // pred_check
          %p228 = pneg %p134
        $region18: #{tpu_custom_call.1} parent=11 // pred_check_branch
          %230 = sbr.rel (%p228) target = $region20
        $region19: #{tpu_custom_call.1} parent=11 // pred_region
          %p231 = scmp.lt.s32.totalorder %s28, 0
          %s232 = scalar_select %p231, %s28, 0
          %s233 = smul.addr %s232, 4
          %s234 = scalar_lea.vmem %s4, %s233
        $region20: #{tpu_custom_call.1} parent=11 // pred_fallthru
          _
        // Predicated region
        $region21: #{tpu_custom_call.1} parent=11 // pred_check
          %p235 = pneg %p155
        $region22: #{tpu_custom_call.1} parent=11 // pred_check_branch
          %237 = sbr.rel (%p235) target = $region24
        $region23: #{tpu_custom_call.1} parent=11 // pred_region
          %s239 = ssub.s32 1024, 1024
          %240 = vsyncadd [#allocation10], %s239
          %s241 = sshll.u32 [#allocation11], 4
          %s242 = int_to_ptr.vmem [resolvable:$true] %s241
          %247 = dma.hbm_to_vmem [thread:$0]  %s5, 1024, %s242, [#allocation10], 64, 64, 4
        $region24: #{tpu_custom_call.1} parent=11 // pred_fallthru
          _
        // Predicated region
        $region25: #{tpu_custom_call.1} parent=11 // pred_check
          %p248 = pneg %p176
        $region26: #{tpu_custom_call.1} parent=11 // pred_check_branch
          %250 = sbr.rel (%p248) target = $region28
        $region27: #{tpu_custom_call.1} parent=11 // pred_region
          _
        $region28: #{tpu_custom_call.1} parent=11 // pred_fallthru
          _
      $region12: #{tpu_custom_call.1} parent=5 // pred_fallthru
        _
      %p251 = scmp.lt.s32.totalorder %s18, 2
      // Predicated region
      $region29: #{tpu_custom_call.1} parent=5 // pred_check
        %p252 = pneg %p251
      $region30: #{tpu_custom_call.1} parent=5 // pred_check_branch
        %254 = sbr.rel (%p252) target = $region32
      $region31: #{tpu_custom_call.1} parent=5 // pred_region
        // Predicated region
        $region33: #{tpu_custom_call.1} parent=31 // pred_check
          %p255 = pneg %p76
        $region34: #{tpu_custom_call.1} parent=31 // pred_check_branch
          %257 = sbr.rel (%p255) target = $region36
        $region35: #{tpu_custom_call.1} parent=31 // pred_region
          %s258 = sand.u32 %s18, 1
          %s259 = scalar_lea.sflag [#allocation10], %s258
          %s260 = sand.u32 %s66, 1
          %s261 = smul.addr %s260, 64
          %s262 = scalar_lea.vmem [#allocation9], %s261
          %s264 = ssub.s32 1024, 1024
          %265 = vsyncadd %s259, %s264
          %s266 = smul.addr %s25, 16
          %s267 = smul.addr %s266, 64
          %s268 = scalar_lea.hbm %s2, %s267
          %s269 = sshll.u32 %s262, 4
          %s270 = int_to_ptr.vmem [resolvable:$true] %s269
          %275 = dma.hbm_to_vmem [thread:$0]  %s268, 1024, %s270, %s259, 64, 64, 4
        $region36: #{tpu_custom_call.1} parent=31 // pred_fallthru
          _
        // Predicated region
        $region37: #{tpu_custom_call.1} parent=31 // pred_check
          %p276 = pneg %p102
        $region38: #{tpu_custom_call.1} parent=31 // pred_check_branch
          %278 = sbr.rel (%p276) target = $region40
        $region39: #{tpu_custom_call.1} parent=31 // pred_region
          %p279 = scmp.lt.s32.totalorder %s25, 1
          %s280 = scalar_select %p279, %s25, 1
          %s281 = scalar_lea.vmem %s3, %s280
        $region40: #{tpu_custom_call.1} parent=31 // pred_fallthru
          _
      $region32: #{tpu_custom_call.1} parent=5 // pred_fallthru
        _
      %p282 = scmp.le.s32.totalorder 1, %s18
      %p283 = scmp.lt.s32.totalorder %s18, 3
      %p284 = pnand %p282, %p283
      %p285 = pneg %p284
      // Predicated region
      $region41: #{tpu_custom_call.1} parent=5 // pred_check
        _
      $region42: #{tpu_custom_call.1} parent=5 // pred_check_branch
        %287 = sbr.rel (%p284) target = $region44
      $region43: #{tpu_custom_call.1} parent=5 // pred_region
        %s288 = ssub.s32 %s18, 1
        // Predicated region
        $region45: #{tpu_custom_call.1} parent=43 // pred_check
          %p289 = pneg %p56
        $region46: #{tpu_custom_call.1} parent=43 // pred_check_branch
          %291 = sbr.rel (%p289) target = $region48
        $region47: #{tpu_custom_call.1} parent=43 // pred_region
          %292 = dma.done [#allocation7], 1024
        $region48: #{tpu_custom_call.1} parent=43 // pred_fallthru
          _
        %s293 = sand.u32 %s23, 1
        %s294 = scalar_lea.sflag [#allocation10], %s293
        %s295 = sand.u32 %s69, 1
        %s296 = smul.addr %s295, 64
        %s297 = scalar_lea.vmem [#allocation9], %s296
        // Predicated region
        $region49: #{tpu_custom_call.1} parent=43 // pred_check
          %p298 = pneg %p82
        $region50: #{tpu_custom_call.1} parent=43 // pred_check_branch
          %300 = sbr.rel (%p298) target = $region52
        $region51: #{tpu_custom_call.1} parent=43 // pred_region
          %301 = dma.done %s294, 1024
        $region52: #{tpu_custom_call.1} parent=43 // pred_fallthru
          _
        // Predicated region
        $region53: #{tpu_custom_call.1} parent=43 // pred_check
          %p302 = pneg %p155
        $region54: #{tpu_custom_call.1} parent=43 // pred_check_branch
          %304 = sbr.rel (%p302) target = $region56
        $region55: #{tpu_custom_call.1} parent=43 // pred_region
          %305 = dma.done [#allocation10], 1024
        $region56: #{tpu_custom_call.1} parent=43 // pred_fallthru
          _
        %p306 = pneg %p56
        %p307 = pneg %p53
        %s308 = sand.u32 %s23, 1
        %s309 = scalar_lea.sflag [#allocation10], %s308
        %s310 = sand.u32 %s69, 1
        %s311 = smul.addr %s310, 64
        %s312 = scalar_lea.vmem [#allocation9], %s311
        %p313 = pneg %p82
        %p314 = pneg %p79
        %p315 = scmp.lt.s32.totalorder %s27, 1
        %s316 = scalar_select %p315, %s27, 1
        %s317 = scalar_lea.vmem %s3, %s316
        %p318 = pneg %p108
        %p319 = pneg %p105
        %p320 = scmp.lt.s32.totalorder %s28, 0
        %s321 = scalar_select %p320, %s28, 0
        %s322 = smul.addr %s321, 4
        %s323 = scalar_lea.vmem %s4, %s322
        %p324 = pneg %p134
        %p325 = pneg %p131
        %p326 = pneg %p155
        %p327 = pneg %p152
        %p328 = pneg %p176
        %p329 = pneg %p173
        %p330 = pneg %p197
        %p331 = pneg %p194
        %s332 = smul.u32 16, %s28
        %p333 = scmp.lt.s32.totalorder %s27, 1
        %s334 = scalar_select %p333, %s27, 1
        %s335 = scalar_lea.vmem %s3, %s334
        %p336 = scmp.lt.s32.totalorder %s28, 0
        %s337 = scalar_select %p336, %s28, 0
        %s338 = smul.addr %s337, 4
        %s339 = scalar_lea.vmem %s4, %s338
        %p341 = scmp.eq.s32.totalorder %s27, 1
        %p342 = scmp.eq.s32.totalorder %s27, 0
        %p343 = scmp.eq.s32.totalorder %s28, 0
        %p344 = pnand %p342, %p343
        %p345 = pneg %p344
        // Predicated region
        $region57: #{tpu_custom_call.1} parent=43 // pred_check
          _
        $region58: #{tpu_custom_call.1} parent=43 // pred_check_branch
          %347 = sbr.rel (%p344) target = $region60
        $region59: #{tpu_custom_call.1} parent=43 // pred_region
          // Predicated region
          $region61: #{tpu_custom_call.1} parent=59 // pred_check
            _
          $region62: #{tpu_custom_call.1} parent=59 // pred_check_branch
            %349 = sbr.rel target = $region64
          $region63: #{tpu_custom_call.1} parent=59 // pred_region
            %350 = sst [smem:[#allocation15]] [#allocation14]
            %351 = sst [smem:[#allocation16]] [#allocation13]
          $region64: #{tpu_custom_call.1} parent=59 // pred_fallthru
            _
          %353 = shalt.err (0)
          %s355 = sshll.u32 [#allocation2], 4
          %s356 = int_to_ptr.vmem [resolvable:$true] %s355
          %358 = dma.hbm_to_vmem [thread:$0]  %s1, 1024, %s356, [#allocation5]
          %s359 = smul.u32 4, 16
          %s360 = smul.u32 %s359, 1
          %s361 = sshll.u32 %s360, 4
          %362 = dma.done [#allocation5], %s361
        $region60: #{tpu_custom_call.1} parent=43 // pred_fallthru
          _
        %p363 = pnand %p341, %p343
        %p364 = pneg %p363
        // Predicated region
        $region65: #{tpu_custom_call.1} parent=43 // pred_check
          _
        $region66: #{tpu_custom_call.1} parent=43 // pred_check_branch
          %366 = sbr.rel (%p363) target = $region68
        $region67: #{tpu_custom_call.1} parent=43 // pred_region
          %367 = vst [vmem:[#allocation4] sm:$0xff] 0.0
        $region68: #{tpu_custom_call.1} parent=43 // pred_fallthru
          _
        %s368 = smul.u32 %s28, 128
        %p369 = scmp.lt.s32.totalorder %s27, 0
        %s370 = ssub.s32 0, %s27
        %s371 = scalar_select %p369, %s370, %s27
        %s372 = sand.u32 %s371, 1
        %s373 = ssub.s32 0, %s372
        %s374 = scalar_select %p369, %s373, %s372
        %p375 = scmp.ne.s32.totalorder %s374, 0
        %p376 = scmp.lt.s32.totalorder %s374, 0
        %p377 = pnand %p376, %p375
        %p378 = pneg %p377
        %s379 = sadd.s32 %s374, 2
        %s380 = scalar_select %p378, %s379, %s374
        %p381 = scmp.eq.s32.totalorder %s380, 0
        // Predicated region
        $region69: #{tpu_custom_call.1} parent=43 // pred_check
          %p382 = pneg %p381
        $region70: #{tpu_custom_call.1} parent=43 // pred_check_branch
          %384 = sbr.rel (%p382) target = $region72
        $region71: #{tpu_custom_call.1} parent=43 // pred_region
          %v385 = vld [vmem:[#allocation6] sm:$0xf]
          %v386 = vld [vmem:[#allocation6 + $0x4] sm:$0xf]
          %v387 = vld [vmem:[#allocation6 + $0x8] sm:$0xf]
          %v388 = vld [vmem:[#allocation6 + $0xc] sm:$0xf]
          %v389 = vld [vmem:[#allocation6 + $0x10] sm:$0xf]
          %v390 = vld [vmem:[#allocation6 + $0x14] sm:$0xf]
          %v391 = vld [vmem:[#allocation6 + $0x18] sm:$0xf]
          %v392 = vld [vmem:[#allocation6 + $0x1c] sm:$0xf]
          %v393 = vld [vmem:[#allocation6 + $0x20] sm:$0xf]
          %v394 = vld [vmem:[#allocation6 + $0x24] sm:$0xf]
          %v395 = vld [vmem:[#allocation6 + $0x28] sm:$0xf]
          %v396 = vld [vmem:[#allocation6 + $0x2c] sm:$0xf]
          %v397 = vld [vmem:[#allocation6 + $0x30] sm:$0xf]
          %v398 = vld [vmem:[#allocation6 + $0x34] sm:$0xf]
          %v399 = vld [vmem:[#allocation6 + $0x38] sm:$0xf]
          %v400 = vld [vmem:[#allocation6 + $0x3c] sm:$0xf]
          %v401 = vld [vmem:[#allocation2] sm:$0xff]
          %v402 = vld [vmem:[#allocation2 + $0x8] sm:$0xff]
          %v403 = vld [vmem:[#allocation2 + $0x10] sm:$0xff]
          %v404 = vld [vmem:[#allocation2 + $0x18] sm:$0xff]
          %v405 = vld [vmem:[#allocation2 + $0x20] sm:$0xff]
          %v406 = vld [vmem:[#allocation2 + $0x28] sm:$0xff]
          %v407 = vld [vmem:[#allocation2 + $0x30] sm:$0xff]
          %v408 = vld [vmem:[#allocation2 + $0x38] sm:$0xff]
          %v425 = vunpack.c.l.b16 %v385
          %v426 = vunpack.c.l.b16 %v386
          %v427 = vunpack.c.l.b16 %v387
          %v428 = vunpack.c.l.b16 %v388
          %v429 = vunpack.c.l.b16 %v389
          %v430 = vunpack.c.l.b16 %v390
          %v431 = vunpack.c.l.b16 %v391
          %v432 = vunpack.c.l.b16 %v392
          %v433 = vunpack.c.l.b16 %v393
          %v434 = vunpack.c.l.b16 %v394
          %v435 = vunpack.c.l.b16 %v395
          %v436 = vunpack.c.l.b16 %v396
          %v437 = vunpack.c.l.b16 %v397
          %v438 = vunpack.c.l.b16 %v398
          %v439 = vunpack.c.l.b16 %v399
          %v440 = vunpack.c.l.b16 %v400
          %v441 = vpack.c.b16 %v426, %v425
          %v442 = vpack.c.b16 %v428, %v427
          %v443 = vpack.c.b16 %v430, %v429
          %v444 = vpack.c.b16 %v432, %v431
          %v445 = vpack.c.b16 %v434, %v433
          %v446 = vpack.c.b16 %v436, %v435
          %v447 = vpack.c.b16 %v438, %v437
          %v448 = vpack.c.b16 %v440, %v439
          %457 = vmatprep.subr.bf16.mxu0 0
          %458 = vmatpush1.bf16.msra.mxu0 %v401
          %459 = vmatprep.subr.bf16.mxu0 0
          %460 = vmatpush1.bf16.msra.mxu0 %v402
          %461 = vmatprep.subr.bf16.mxu0 0
          %462 = vmatpush1.bf16.msra.mxu0 %v403
          %463 = vmatprep.subr.bf16.mxu0 0
          %464 = vmatpush1.bf16.msra.mxu0 %v404
          %465 = vmatprep.subr.bf16.mxu0 0
          %466 = vmatpush1.bf16.msra.mxu0 %v405
          %467 = vmatprep.subr.bf16.mxu0 0
          %468 = vmatpush1.bf16.msra.mxu0 %v406
          %469 = vmatprep.subr.bf16.mxu0 0
          %470 = vmatpush1.bf16.msra.mxu0 %v407
          %471 = vmatprep.subr.bf16.mxu0 0
          %472 = vmatpush1.bf16.msra.mxu0 %v408
          %473 = vmatprep.subr.bf16.mxu0 0
          %474 = vmatpush1.bf16.msra.mxu0 0
          %475 = vmatprep.subr.bf16.mxu0 0
          %476 = vmatpush1.bf16.msra.mxu0 0
          %477 = vmatprep.subr.bf16.mxu0 0
          %478 = vmatpush1.bf16.msra.mxu0 0
          %479 = vmatprep.subr.bf16.mxu0 0
          %480 = vmatpush1.bf16.msra.mxu0 0
          %481 = vmatprep.subr.bf16.mxu0 0
          %482 = vmatpush1.bf16.msra.mxu0 0
          %483 = vmatprep.subr.bf16.mxu0 0
          %484 = vmatpush1.bf16.msra.mxu0 0
          %485 = vmatprep.subr.bf16.mxu0 0
          %486 = vmatpush1.bf16.msra.mxu0 0
          %487 = vmatprep.subr.bf16.mxu0 0
          %488 = vmatpush1.bf16.msra.mxu0 0
          %489 = vmatprep.mubr.bf16.mxu0 0
          %490 = vmatmul.mubr.bf16.gmra.mrb[0].mxu0 %v441
          %v491 = vpop.f32.mrb[0].mxu0
          %v492 = vadd.f32 0.0, %v491
          %v493 = vpop.f32.mrb[0].mxu0
          %v494 = vpop.f32.mrb[0].mxu0
          %v495 = vadd.f32 0.0, %v494
          %v496 = vpop.f32.mrb[0].mxu0
          %497 = vmatprep.mubr.bf16.mxu0 0
          %498 = vmatmul.mubr.bf16.gmra.mrb[0].mxu0 %v442
          %v499 = vpop.f32.mrb[0].mxu0
          %v500 = vadd.f32 0.0, %v499
          %v501 = vpop.f32.mrb[0].mxu0
          %v502 = vpop.f32.mrb[0].mxu0
          %v503 = vadd.f32 0.0, %v502
          %v504 = vpop.f32.mrb[0].mxu0
          %505 = vmatprep.mubr.bf16.mxu0 0
          %506 = vmatmul.mubr.bf16.gmra.mrb[0].mxu0 %v443
          %v507 = vpop.f32.mrb[0].mxu0
          %v508 = vadd.f32 0.0, %v507
          %v509 = vpop.f32.mrb[0].mxu0
          %v510 = vpop.f32.mrb[0].mxu0
          %v511 = vadd.f32 0.0, %v510
          %v512 = vpop.f32.mrb[0].mxu0
          %513 = vmatprep.mubr.bf16.mxu0 0
          %514 = vmatmul.mubr.bf16.gmra.mrb[0].mxu0 %v444
          %v515 = vpop.f32.mrb[0].mxu0
          %v516 = vadd.f32 0.0, %v515
          %v517 = vpop.f32.mrb[0].mxu0
          %v518 = vpop.f32.mrb[0].mxu0
          %v519 = vadd.f32 0.0, %v518
          %v520 = vpop.f32.mrb[0].mxu0
          %521 = vmatprep.mubr.bf16.mxu0 0
          %522 = vmatmul.mubr.bf16.gmra.mrb[0].mxu0 %v445
          %v523 = vpop.f32.mrb[0].mxu0
          %v524 = vadd.f32 0.0, %v523
          %v525 = vpop.f32.mrb[0].mxu0
          %v526 = vpop.f32.mrb[0].mxu0
          %v527 = vadd.f32 0.0, %v526
          %v528 = vpop.f32.mrb[0].mxu0
          %529 = vmatprep.mubr.bf16.mxu0 0
          %530 = vmatmul.mubr.bf16.gmra.mrb[0].mxu0 %v446
          %v531 = vpop.f32.mrb[0].mxu0
          %v532 = vadd.f32 0.0, %v531
          %v533 = vpop.f32.mrb[0].mxu0
          %v534 = vpop.f32.mrb[0].mxu0
          %v535 = vadd.f32 0.0, %v534
          %v536 = vpop.f32.mrb[0].mxu0
          %537 = vmatprep.mubr.bf16.mxu0 0
          %538 = vmatmul.mubr.bf16.gmra.mrb[0].mxu0 %v447
          %v539 = vpop.f32.mrb[0].mxu0
          %v540 = vadd.f32 0.0, %v539
          %v541 = vpop.f32.mrb[0].mxu0
          %v542 = vpop.f32.mrb[0].mxu0
          %v543 = vadd.f32 0.0, %v542
          %v544 = vpop.f32.mrb[0].mxu0
          %545 = vmatprep.mubr.bf16.mxu0 0
          %546 = vmatmul.mubr.bf16.gmra.mrb[0].mxu0 %v448
          %v547 = vpop.f32.mrb[0].mxu0
          %v548 = vadd.f32 0.0, %v547
          %v549 = vpop.f32.mrb[0].mxu0
          %v550 = vpop.f32.mrb[0].mxu0
          %v551 = vadd.f32 0.0, %v550
          %v552 = vpop.f32.mrb[0].mxu0
          %553 = vdwg.mxu0
          %v554 = vpack.c.bf16 %v495, %v492
          %v555 = vpack.c.bf16 %v503, %v500
          %v556 = vpack.c.bf16 %v511, %v508
          %v557 = vpack.c.bf16 %v519, %v516
          %v558 = vpack.c.bf16 %v527, %v524
          %v559 = vpack.c.bf16 %v535, %v532
          %v560 = vpack.c.bf16 %v543, %v540
          %v561 = vpack.c.bf16 %v551, %v548
          %v562 = vld [vmem:[%s297] sm:$0xf]
          %v563 = vld [vmem:[%s297 + $0x4] sm:$0xf]
          %v564 = vld [vmem:[%s297 + $0x8] sm:$0xf]
          %v565 = vld [vmem:[%s297 + $0xc] sm:$0xf]
          %v566 = vld [vmem:[%s297 + $0x10] sm:$0xf]
          %v567 = vld [vmem:[%s297 + $0x14] sm:$0xf]
          %v568 = vld [vmem:[%s297 + $0x18] sm:$0xf]
          %v569 = vld [vmem:[%s297 + $0x1c] sm:$0xf]
          %v570 = vld [vmem:[%s297 + $0x20] sm:$0xf]
          %v571 = vld [vmem:[%s297 + $0x24] sm:$0xf]
          %v572 = vld [vmem:[%s297 + $0x28] sm:$0xf]
          %v573 = vld [vmem:[%s297 + $0x2c] sm:$0xf]
          %v574 = vld [vmem:[%s297 + $0x30] sm:$0xf]
          %v575 = vld [vmem:[%s297 + $0x34] sm:$0xf]
          %v576 = vld [vmem:[%s297 + $0x38] sm:$0xf]
          %v577 = vld [vmem:[%s297 + $0x3c] sm:$0xf]
          %v578 = vld [vmem:[%s335] sm:$0x1]
          %v580 = vlaneseq
          %v581 = vshrl.u32 %v580, 7
          %v582 = vsub.s32 0, %v581
          %v583 = vrot.slane %v578, %v582
          %v601 = vunpack.c.l.b16 %v562
          %v602 = vunpack.c.l.b16 %v563
          %v603 = vunpack.c.l.b16 %v564
          %v604 = vunpack.c.l.b16 %v565
          %v605 = vunpack.c.l.b16 %v566
          %v606 = vunpack.c.l.b16 %v567
          %v607 = vunpack.c.l.b16 %v568
          %v608 = vunpack.c.l.b16 %v569
          %v609 = vunpack.c.l.b16 %v570
          %v610 = vunpack.c.l.b16 %v571
          %v611 = vunpack.c.l.b16 %v572
          %v612 = vunpack.c.l.b16 %v573
          %v613 = vunpack.c.l.b16 %v574
          %v614 = vunpack.c.l.b16 %v575
          %v615 = vunpack.c.l.b16 %v576
          %v616 = vunpack.c.l.b16 %v577
          %v617 = vpack.c.b16 %v602, %v601
          %v618 = vpack.c.b16 %v604, %v603
          %v619 = vpack.c.b16 %v606, %v605
          %v620 = vpack.c.b16 %v608, %v607
          %v621 = vpack.c.b16 %v610, %v609
          %v622 = vpack.c.b16 %v612, %v611
          %v623 = vpack.c.b16 %v614, %v613
          %v624 = vpack.c.b16 %v616, %v615
          %633 = vmatprep.subr.bf16.mxu0 0
          %634 = vmatpush1.bf16.msra.mxu0 %v617
          %635 = vmatprep.subr.bf16.mxu0 0
          %636 = vmatpush1.bf16.msra.mxu0 %v618
          %637 = vmatprep.subr.bf16.mxu0 0
          %638 = vmatpush1.bf16.msra.mxu0 %v619
          %639 = vmatprep.subr.bf16.mxu0 0
          %640 = vmatpush1.bf16.msra.mxu0 %v620
          %641 = vmatprep.subr.bf16.mxu0 0
          %642 = vmatpush1.bf16.msra.mxu0 %v621
          %643 = vmatprep.subr.bf16.mxu0 0
          %644 = vmatpush1.bf16.msra.mxu0 %v622
          %645 = vmatprep.subr.bf16.mxu0 0
          %646 = vmatpush1.bf16.msra.mxu0 %v623
          %647 = vmatprep.subr.bf16.mxu0 0
          %648 = vmatpush1.bf16.msra.mxu0 %v624
          %649 = vmatprep.subr.bf16.mxu0 0
          %650 = vmatpush1.bf16.msra.mxu0 0
          %651 = vmatprep.subr.bf16.mxu0 0
          %652 = vmatpush1.bf16.msra.mxu0 0
          %653 = vmatprep.subr.bf16.mxu0 0
          %654 = vmatpush1.bf16.msra.mxu0 0
          %655 = vmatprep.subr.bf16.mxu0 0
          %656 = vmatpush1.bf16.msra.mxu0 0
          %657 = vmatprep.subr.bf16.mxu0 0
          %658 = vmatpush1.bf16.msra.mxu0 0
          %659 = vmatprep.subr.bf16.mxu0 0
          %660 = vmatpush1.bf16.msra.mxu0 0
          %661 = vmatprep.subr.bf16.mxu0 0
          %662 = vmatpush1.bf16.msra.mxu0 0
          %663 = vmatprep.subr.bf16.mxu0 0
          %664 = vmatpush1.bf16.msra.mxu0 0
          %665 = vmatprep.mubr.bf16.mxu0 0
          %666 = vmatmul.mubr.bf16.gmra.mrb[0].mxu0 %v554
          %v667 = vpop.f32.mrb[0].mxu0
          %v668 = vadd.f32 %v583, %v667
          %v669 = vpop.f32.mrb[0].mxu0
          %v670 = vpop.f32.mrb[0].mxu0
          %v671 = vadd.f32 %v583, %v670
          %v672 = vpop.f32.mrb[0].mxu0
          %673 = vmatprep.mubr.bf16.mxu0 0
          %674 = vmatmul.mubr.bf16.gmra.mrb[0].mxu0 %v555
          %v675 = vpop.f32.mrb[0].mxu0
          %v676 = vadd.f32 %v583, %v675
          %v677 = vpop.f32.mrb[0].mxu0
          %v678 = vpop.f32.mrb[0].mxu0
          %v679 = vadd.f32 %v583, %v678
          %v680 = vpop.f32.mrb[0].mxu0
          %681 = vmatprep.mubr.bf16.mxu0 0
          %682 = vmatmul.mubr.bf16.gmra.mrb[0].mxu0 %v556
          %v683 = vpop.f32.mrb[0].mxu0
          %v684 = vadd.f32 %v583, %v683
          %v685 = vpop.f32.mrb[0].mxu0
          %v686 = vpop.f32.mrb[0].mxu0
          %v687 = vadd.f32 %v583, %v686
          %v688 = vpop.f32.mrb[0].mxu0
          %689 = vmatprep.mubr.bf16.mxu0 0
          %690 = vmatmul.mubr.bf16.gmra.mrb[0].mxu0 %v557
          %v691 = vpop.f32.mrb[0].mxu0
          %v692 = vadd.f32 %v583, %v691
          %v693 = vpop.f32.mrb[0].mxu0
          %v694 = vpop.f32.mrb[0].mxu0
          %v695 = vadd.f32 %v583, %v694
          %v696 = vpop.f32.mrb[0].mxu0
          %697 = vmatprep.mubr.bf16.mxu0 0
          %698 = vmatmul.mubr.bf16.gmra.mrb[0].mxu0 %v558
          %v699 = vpop.f32.mrb[0].mxu0
          %v700 = vadd.f32 %v583, %v699
          %v701 = vpop.f32.mrb[0].mxu0
          %v702 = vpop.f32.mrb[0].mxu0
          %v703 = vadd.f32 %v583, %v702
          %v704 = vpop.f32.mrb[0].mxu0
          %705 = vmatprep.mubr.bf16.mxu0 0
          %706 = vmatmul.mubr.bf16.gmra.mrb[0].mxu0 %v559
          %v707 = vpop.f32.mrb[0].mxu0
          %v708 = vadd.f32 %v583, %v707
          %v709 = vpop.f32.mrb[0].mxu0
          %v710 = vpop.f32.mrb[0].mxu0
          %v711 = vadd.f32 %v583, %v710
          %v712 = vpop.f32.mrb[0].mxu0
          %713 = vmatprep.mubr.bf16.mxu0 0
          %714 = vmatmul.mubr.bf16.gmra.mrb[0].mxu0 %v560
          %v715 = vpop.f32.mrb[0].mxu0
          %v716 = vadd.f32 %v583, %v715
          %v717 = vpop.f32.mrb[0].mxu0
          %v718 = vpop.f32.mrb[0].mxu0
          %v719 = vadd.f32 %v583, %v718
          %v720 = vpop.f32.mrb[0].mxu0
          %721 = vmatprep.mubr.bf16.mxu0 0
          %722 = vmatmul.mubr.bf16.gmra.mrb[0].mxu0 %v561
          %v723 = vpop.f32.mrb[0].mxu0
          %v724 = vadd.f32 %v583, %v723
          %v725 = vpop.f32.mrb[0].mxu0
          %v726 = vpop.f32.mrb[0].mxu0
          %v727 = vadd.f32 %v583, %v726
          %v728 = vpop.f32.mrb[0].mxu0
          %729 = vdwg.mxu0
          %v730 = vmax.f32 %v668, 0.0
          %v731 = vmax.f32 %v671, 0.0
          %v732 = vmax.f32 %v676, 0.0
          %v733 = vmax.f32 %v679, 0.0
          %v734 = vmax.f32 %v684, 0.0
          %v735 = vmax.f32 %v687, 0.0
          %v736 = vmax.f32 %v692, 0.0
          %v737 = vmax.f32 %v695, 0.0
          %v738 = vmax.f32 %v700, 0.0
          %v739 = vmax.f32 %v703, 0.0
          %v740 = vmax.f32 %v708, 0.0
          %v741 = vmax.f32 %v711, 0.0
          %v742 = vmax.f32 %v716, 0.0
          %v743 = vmax.f32 %v719, 0.0
          %v744 = vmax.f32 %v724, 0.0
          %v745 = vmax.f32 %v727, 0.0
          %v746 = vpack.c.bf16 %v731, %v730
          %v747 = vpack.c.bf16 %v733, %v732
          %v748 = vpack.c.bf16 %v735, %v734
          %v749 = vpack.c.bf16 %v737, %v736
          %v750 = vpack.c.bf16 %v739, %v738
          %v751 = vpack.c.bf16 %v741, %v740
          %v752 = vpack.c.bf16 %v743, %v742
          %v753 = vpack.c.bf16 %v745, %v744
          %s754 = sshra.s32 %s368, 4
          %s755 = sand.u32 %s368, 15
          %s756 = smul.addr %s754, 8
          %s757 = scalar_lea.vmem [#allocation3], %s756
          %758 = vst [vmem:[%s757] sm:$0xff] %v746
          %759 = vst [vmem:[%s757 + $0x8] sm:$0xff] %v747
          %760 = vst [vmem:[%s757 + $0x10] sm:$0xff] %v748
          %761 = vst [vmem:[%s757 + $0x18] sm:$0xff] %v749
          %762 = vst [vmem:[%s757 + $0x20] sm:$0xff] %v750
          %763 = vst [vmem:[%s757 + $0x28] sm:$0xff] %v751
          %764 = vst [vmem:[%s757 + $0x30] sm:$0xff] %v752
          %765 = vst [vmem:[%s757 + $0x38] sm:$0xff] %v753
          // Predicated region
          $region73: #{tpu_custom_call.1} parent=71 // pred_check
            %p766 = pneg %p341
          $region74: #{tpu_custom_call.1} parent=71 // pred_check_branch
            %768 = sbr.rel (%p766) target = $region76
          $region75: #{tpu_custom_call.1} parent=71 // pred_region
            %v769 = vld [vmem:[#allocation4] sm:$0xff]
            %v770 = vld [vmem:[%s339] sm:$0xf]
            %771 = vmatprep.subr.bf16.mxu0 0
            %772 = vmatpush1.bf16.msra.mxu0 %v746
            %773 = vmatprep.subr.bf16.mxu0 0
            %774 = vmatpush1.bf16.msra.mxu0 %v747
            %775 = vmatprep.subr.bf16.mxu0 0
            %776 = vmatpush1.bf16.msra.mxu0 %v748
            %777 = vmatprep.subr.bf16.mxu0 0
            %778 = vmatpush1.bf16.msra.mxu0 %v749
            %779 = vmatprep.subr.bf16.mxu0 0
            %780 = vmatpush1.bf16.msra.mxu0 %v750
            %781 = vmatprep.subr.bf16.mxu0 0
            %782 = vmatpush1.bf16.msra.mxu0 %v751
            %783 = vmatprep.subr.bf16.mxu0 0
            %784 = vmatpush1.bf16.msra.mxu0 %v752
            %785 = vmatprep.subr.bf16.mxu0 0
            %786 = vmatpush1.bf16.msra.mxu0 %v753
            %787 = vmatprep.subr.bf16.mxu0 0
            %788 = vmatpush1.bf16.msra.mxu0 0
            %789 = vmatprep.subr.bf16.mxu0 0
            %790 = vmatpush1.bf16.msra.mxu0 0
            %791 = vmatprep.subr.bf16.mxu0 0
            %792 = vmatpush1.bf16.msra.mxu0 0
            %793 = vmatprep.subr.bf16.mxu0 0
            %794 = vmatpush1.bf16.msra.mxu0 0
            %795 = vmatprep.subr.bf16.mxu0 0
            %796 = vmatpush1.bf16.msra.mxu0 0
            %797 = vmatprep.subr.bf16.mxu0 0
            %798 = vmatpush1.bf16.msra.mxu0 0
            %799 = vmatprep.subr.bf16.mxu0 0
            %800 = vmatpush1.bf16.msra.mxu0 0
            %801 = vmatprep.subr.bf16.mxu0 0
            %802 = vmatpush1.bf16.msra.mxu0 0
            %803 = vmatprep.mubr.bf16.mxu0 0
            %804 = vmatmul.mubr.bf16.gmra.mrb[0].mxu0 %v770
            %v805 = vpop.f32.mrb[0].mxu0
            %v806 = vadd.f32 0.0, %v805
            %v807 = vpop.f32.mrb[0].mxu0
            %v808 = vpop.f32.mrb[0].mxu0
            %v809 = vpop.f32.mrb[0].mxu0
            %810 = vdwg.mxu0
            %v811 = vadd.f32 %v769, %v806
            %812 = vst [vmem:[#allocation4] sm:$0xff] %v811
          $region76: #{tpu_custom_call.1} parent=71 // pred_fallthru
            _
        $region72: #{tpu_custom_call.1} parent=43 // pred_fallthru
          _
        %p813 = scmp.eq.s32.totalorder %s380, 1
        // Predicated region
        $region77: #{tpu_custom_call.1} parent=43 // pred_check
          %p814 = pneg %p813
        $region78: #{tpu_custom_call.1} parent=43 // pred_check_branch
          %816 = sbr.rel (%p814) target = $region80
        $region79: #{tpu_custom_call.1} parent=43 // pred_region
          %v817 = vld [vmem:[#allocation6] sm:$0xf]
          %v818 = vld [vmem:[#allocation6 + $0x4] sm:$0xf]
          %v819 = vld [vmem:[#allocation6 + $0x8] sm:$0xf]
          %v820 = vld [vmem:[#allocation6 + $0xc] sm:$0xf]
          %v821 = vld [vmem:[#allocation6 + $0x10] sm:$0xf]
          %v822 = vld [vmem:[#allocation6 + $0x14] sm:$0xf]
          %v823 = vld [vmem:[#allocation6 + $0x18] sm:$0xf]
          %v824 = vld [vmem:[#allocation6 + $0x1c] sm:$0xf]
          %v825 = vld [vmem:[#allocation6 + $0x20] sm:$0xf]
          %v826 = vld [vmem:[#allocation6 + $0x24] sm:$0xf]
          %v827 = vld [vmem:[#allocation6 + $0x28] sm:$0xf]
          %v828 = vld [vmem:[#allocation6 + $0x2c] sm:$0xf]
          %v829 = vld [vmem:[#allocation6 + $0x30] sm:$0xf]
          %v830 = vld [vmem:[#allocation6 + $0x34] sm:$0xf]
          %v831 = vld [vmem:[#allocation6 + $0x38] sm:$0xf]
          %v832 = vld [vmem:[#allocation6 + $0x3c] sm:$0xf]
          %v833 = vld [vmem:[#allocation3] sm:$0xff]
          %v834 = vld [vmem:[#allocation3 + $0x8] sm:$0xff]
          %v835 = vld [vmem:[#allocation3 + $0x10] sm:$0xff]
          %v836 = vld [vmem:[#allocation3 + $0x18] sm:$0xff]
          %v837 = vld [vmem:[#allocation3 + $0x20] sm:$0xff]
          %v838 = vld [vmem:[#allocation3 + $0x28] sm:$0xff]
          %v839 = vld [vmem:[#allocation3 + $0x30] sm:$0xff]
          %v840 = vld [vmem:[#allocation3 + $0x38] sm:$0xff]
          %v857 = vunpack.c.l.b16 %v817
          %v858 = vunpack.c.l.b16 %v818
          %v859 = vunpack.c.l.b16 %v819
          %v860 = vunpack.c.l.b16 %v820
          %v861 = vunpack.c.l.b16 %v821
          %v862 = vunpack.c.l.b16 %v822
          %v863 = vunpack.c.l.b16 %v823
          %v864 = vunpack.c.l.b16 %v824
          %v865 = vunpack.c.l.b16 %v825
          %v866 = vunpack.c.l.b16 %v826
          %v867 = vunpack.c.l.b16 %v827
          %v868 = vunpack.c.l.b16 %v828
          %v869 = vunpack.c.l.b16 %v829
          %v870 = vunpack.c.l.b16 %v830
          %v871 = vunpack.c.l.b16 %v831
          %v872 = vunpack.c.l.b16 %v832
          %v873 = vpack.c.b16 %v858, %v857
          %v874 = vpack.c.b16 %v860, %v859
          %v875 = vpack.c.b16 %v862, %v861
          %v876 = vpack.c.b16 %v864, %v863
          %v877 = vpack.c.b16 %v866, %v865
          %v878 = vpack.c.b16 %v868, %v867
          %v879 = vpack.c.b16 %v870, %v869
          %v880 = vpack.c.b16 %v872, %v871
          %889 = vmatprep.subr.bf16.mxu0 0
          %890 = vmatpush1.bf16.msra.mxu0 %v833
          %891 = vmatprep.subr.bf16.mxu0 0
          %892 = vmatpush1.bf16.msra.mxu0 %v834
          %893 = vmatprep.subr.bf16.mxu0 0
          %894 = vmatpush1.bf16.msra.mxu0 %v835
          %895 = vmatprep.subr.bf16.mxu0 0
          %896 = vmatpush1.bf16.msra.mxu0 %v836
          %897 = vmatprep.subr.bf16.mxu0 0
          %898 = vmatpush1.bf16.msra.mxu0 %v837
          %899 = vmatprep.subr.bf16.mxu0 0
          %900 = vmatpush1.bf16.msra.mxu0 %v838
          %901 = vmatprep.subr.bf16.mxu0 0
          %902 = vmatpush1.bf16.msra.mxu0 %v839
          %903 = vmatprep.subr.bf16.mxu0 0
          %904 = vmatpush1.bf16.msra.mxu0 %v840
          %905 = vmatprep.subr.bf16.mxu0 0
          %906 = vmatpush1.bf16.msra.mxu0 0
          %907 = vmatprep.subr.bf16.mxu0 0
          %908 = vmatpush1.bf16.msra.mxu0 0
          %909 = vmatprep.subr.bf16.mxu0 0
          %910 = vmatpush1.bf16.msra.mxu0 0
          %911 = vmatprep.subr.bf16.mxu0 0
          %912 = vmatpush1.bf16.msra.mxu0 0
          %913 = vmatprep.subr.bf16.mxu0 0
          %914 = vmatpush1.bf16.msra.mxu0 0
          %915 = vmatprep.subr.bf16.mxu0 0
          %916 = vmatpush1.bf16.msra.mxu0 0
          %917 = vmatprep.subr.bf16.mxu0 0
          %918 = vmatpush1.bf16.msra.mxu0 0
          %919 = vmatprep.subr.bf16.mxu0 0
          %920 = vmatpush1.bf16.msra.mxu0 0
          %921 = vmatprep.mubr.bf16.mxu0 0
          %922 = vmatmul.mubr.bf16.gmra.mrb[0].mxu0 %v873
          %v923 = vpop.f32.mrb[0].mxu0
          %v924 = vadd.f32 0.0, %v923
          %v925 = vpop.f32.mrb[0].mxu0
          %v926 = vpop.f32.mrb[0].mxu0
          %v927 = vadd.f32 0.0, %v926
          %v928 = vpop.f32.mrb[0].mxu0
          %929 = vmatprep.mubr.bf16.mxu0 0
          %930 = vmatmul.mubr.bf16.gmra.mrb[0].mxu0 %v874
          %v931 = vpop.f32.mrb[0].mxu0
          %v932 = vadd.f32 0.0, %v931
          %v933 = vpop.f32.mrb[0].mxu0
          %v934 = vpop.f32.mrb[0].mxu0
          %v935 = vadd.f32 0.0, %v934
          %v936 = vpop.f32.mrb[0].mxu0
          %937 = vmatprep.mubr.bf16.mxu0 0
          %938 = vmatmul.mubr.bf16.gmra.mrb[0].mxu0 %v875
          %v939 = vpop.f32.mrb[0].mxu0
          %v940 = vadd.f32 0.0, %v939
          %v941 = vpop.f32.mrb[0].mxu0
          %v942 = vpop.f32.mrb[0].mxu0
          %v943 = vadd.f32 0.0, %v942
          %v944 = vpop.f32.mrb[0].mxu0
          %945 = vmatprep.mubr.bf16.mxu0 0
          %946 = vmatmul.mubr.bf16.gmra.mrb[0].mxu0 %v876
          %v947 = vpop.f32.mrb[0].mxu0
          %v948 = vadd.f32 0.0, %v947
          %v949 = vpop.f32.mrb[0].mxu0
          %v950 = vpop.f32.mrb[0].mxu0
          %v951 = vadd.f32 0.0, %v950
          %v952 = vpop.f32.mrb[0].mxu0
          %953 = vmatprep.mubr.bf16.mxu0 0
          %954 = vmatmul.mubr.bf16.gmra.mrb[0].mxu0 %v877
          %v955 = vpop.f32.mrb[0].mxu0
          %v956 = vadd.f32 0.0, %v955
          %v957 = vpop.f32.mrb[0].mxu0
          %v958 = vpop.f32.mrb[0].mxu0
          %v959 = vadd.f32 0.0, %v958
          %v960 = vpop.f32.mrb[0].mxu0
          %961 = vmatprep.mubr.bf16.mxu0 0
          %962 = vmatmul.mubr.bf16.gmra.mrb[0].mxu0 %v878
          %v963 = vpop.f32.mrb[0].mxu0
          %v964 = vadd.f32 0.0, %v963
          %v965 = vpop.f32.mrb[0].mxu0
          %v966 = vpop.f32.mrb[0].mxu0
          %v967 = vadd.f32 0.0, %v966
          %v968 = vpop.f32.mrb[0].mxu0
          %969 = vmatprep.mubr.bf16.mxu0 0
          %970 = vmatmul.mubr.bf16.gmra.mrb[0].mxu0 %v879
          %v971 = vpop.f32.mrb[0].mxu0
          %v972 = vadd.f32 0.0, %v971
          %v973 = vpop.f32.mrb[0].mxu0
          %v974 = vpop.f32.mrb[0].mxu0
          %v975 = vadd.f32 0.0, %v974
          %v976 = vpop.f32.mrb[0].mxu0
          %977 = vmatprep.mubr.bf16.mxu0 0
          %978 = vmatmul.mubr.bf16.gmra.mrb[0].mxu0 %v880
          %v979 = vpop.f32.mrb[0].mxu0
          %v980 = vadd.f32 0.0, %v979
          %v981 = vpop.f32.mrb[0].mxu0
          %v982 = vpop.f32.mrb[0].mxu0
          %v983 = vadd.f32 0.0, %v982
          %v984 = vpop.f32.mrb[0].mxu0
          %985 = vdwg.mxu0
          %v986 = vpack.c.bf16 %v927, %v924
          %v987 = vpack.c.bf16 %v935, %v932
          %v988 = vpack.c.bf16 %v943, %v940
          %v989 = vpack.c.bf16 %v951, %v948
          %v990 = vpack.c.bf16 %v959, %v956
          %v991 = vpack.c.bf16 %v967, %v964
          %v992 = vpack.c.bf16 %v975, %v972
          %v993 = vpack.c.bf16 %v983, %v980
          %v994 = vld [vmem:[%s297] sm:$0xf]
          %v995 = vld [vmem:[%s297 + $0x4] sm:$0xf]
          %v996 = vld [vmem:[%s297 + $0x8] sm:$0xf]
          %v997 = vld [vmem:[%s297 + $0xc] sm:$0xf]
          %v998 = vld [vmem:[%s297 + $0x10] sm:$0xf]
          %v999 = vld [vmem:[%s297 + $0x14] sm:$0xf]
          %v1000 = vld [vmem:[%s297 + $0x18] sm:$0xf]
          %v1001 = vld [vmem:[%s297 + $0x1c] sm:$0xf]
          %v1002 = vld [vmem:[%s297 + $0x20] sm:$0xf]
          %v1003 = vld [vmem:[%s297 + $0x24] sm:$0xf]
          %v1004 = vld [vmem:[%s297 + $0x28] sm:$0xf]
          %v1005 = vld [vmem:[%s297 + $0x2c] sm:$0xf]
          %v1006 = vld [vmem:[%s297 + $0x30] sm:$0xf]
          %v1007 = vld [vmem:[%s297 + $0x34] sm:$0xf]
          %v1008 = vld [vmem:[%s297 + $0x38] sm:$0xf]
          %v1009 = vld [vmem:[%s297 + $0x3c] sm:$0xf]
          %v1010 = vld [vmem:[%s335] sm:$0x1]
          %v1012 = vlaneseq
          %v1013 = vshrl.u32 %v1012, 7
          %v1014 = vsub.s32 0, %v1013
          %v1015 = vrot.slane %v1010, %v1014
          %v1033 = vunpack.c.l.b16 %v994
          %v1034 = vunpack.c.l.b16 %v995
          %v1035 = vunpack.c.l.b16 %v996
          %v1036 = vunpack.c.l.b16 %v997
          %v1037 = vunpack.c.l.b16 %v998
          %v1038 = vunpack.c.l.b16 %v999
          %v1039 = vunpack.c.l.b16 %v1000
          %v1040 = vunpack.c.l.b16 %v1001
          %v1041 = vunpack.c.l.b16 %v1002
          %v1042 = vunpack.c.l.b16 %v1003
          %v1043 = vunpack.c.l.b16 %v1004
          %v1044 = vunpack.c.l.b16 %v1005
          %v1045 = vunpack.c.l.b16 %v1006
          %v1046 = vunpack.c.l.b16 %v1007
          %v1047 = vunpack.c.l.b16 %v1008
          %v1048 = vunpack.c.l.b16 %v1009
          %v1049 = vpack.c.b16 %v1034, %v1033
          %v1050 = vpack.c.b16 %v1036, %v1035
          %v1051 = vpack.c.b16 %v1038, %v1037
          %v1052 = vpack.c.b16 %v1040, %v1039
          %v1053 = vpack.c.b16 %v1042, %v1041
          %v1054 = vpack.c.b16 %v1044, %v1043
          %v1055 = vpack.c.b16 %v1046, %v1045
          %v1056 = vpack.c.b16 %v1048, %v1047
          %1065 = vmatprep.subr.bf16.mxu0 0
          %1066 = vmatpush1.bf16.msra.mxu0 %v1049
          %1067 = vmatprep.subr.bf16.mxu0 0
          %1068 = vmatpush1.bf16.msra.mxu0 %v1050
          %1069 = vmatprep.subr.bf16.mxu0 0
          %1070 = vmatpush1.bf16.msra.mxu0 %v1051
          %1071 = vmatprep.subr.bf16.mxu0 0
          %1072 = vmatpush1.bf16.msra.mxu0 %v1052
          %1073 = vmatprep.subr.bf16.mxu0 0
          %1074 = vmatpush1.bf16.msra.mxu0 %v1053
          %1075 = vmatprep.subr.bf16.mxu0 0
          %1076 = vmatpush1.bf16.msra.mxu0 %v1054
          %1077 = vmatprep.subr.bf16.mxu0 0
          %1078 = vmatpush1.bf16.msra.mxu0 %v1055
          %1079 = vmatprep.subr.bf16.mxu0 0
          %1080 = vmatpush1.bf16.msra.mxu0 %v1056
          %1081 = vmatprep.subr.bf16.mxu0 0
          %1082 = vmatpush1.bf16.msra.mxu0 0
          %1083 = vmatprep.subr.bf16.mxu0 0
          %1084 = vmatpush1.bf16.msra.mxu0 0
          %1085 = vmatprep.subr.bf16.mxu0 0
          %1086 = vmatpush1.bf16.msra.mxu0 0
          %1087 = vmatprep.subr.bf16.mxu0 0
          %1088 = vmatpush1.bf16.msra.mxu0 0
          %1089 = vmatprep.subr.bf16.mxu0 0
          %1090 = vmatpush1.bf16.msra.mxu0 0
          %1091 = vmatprep.subr.bf16.mxu0 0
          %1092 = vmatpush1.bf16.msra.mxu0 0
          %1093 = vmatprep.subr.bf16.mxu0 0
          %1094 = vmatpush1.bf16.msra.mxu0 0
          %1095 = vmatprep.subr.bf16.mxu0 0
          %1096 = vmatpush1.bf16.msra.mxu0 0
          %1097 = vmatprep.mubr.bf16.mxu0 0
          %1098 = vmatmul.mubr.bf16.gmra.mrb[0].mxu0 %v986
          %v1099 = vpop.f32.mrb[0].mxu0
          %v1100 = vadd.f32 %v1015, %v1099
          %v1101 = vpop.f32.mrb[0].mxu0
          %v1102 = vpop.f32.mrb[0].mxu0
          %v1103 = vadd.f32 %v1015, %v1102
          %v1104 = vpop.f32.mrb[0].mxu0
          %1105 = vmatprep.mubr.bf16.mxu0 0
          %1106 = vmatmul.mubr.bf16.gmra.mrb[0].mxu0 %v987
          %v1107 = vpop.f32.mrb[0].mxu0
          %v1108 = vadd.f32 %v1015, %v1107
          %v1109 = vpop.f32.mrb[0].mxu0
          %v1110 = vpop.f32.mrb[0].mxu0
          %v1111 = vadd.f32 %v1015, %v1110
          %v1112 = vpop.f32.mrb[0].mxu0
          %1113 = vmatprep.mubr.bf16.mxu0 0
          %1114 = vmatmul.mubr.bf16.gmra.mrb[0].mxu0 %v988
          %v1115 = vpop.f32.mrb[0].mxu0
          %v1116 = vadd.f32 %v1015, %v1115
          %v1117 = vpop.f32.mrb[0].mxu0
          %v1118 = vpop.f32.mrb[0].mxu0
          %v1119 = vadd.f32 %v1015, %v1118
          %v1120 = vpop.f32.mrb[0].mxu0
          %1121 = vmatprep.mubr.bf16.mxu0 0
          %1122 = vmatmul.mubr.bf16.gmra.mrb[0].mxu0 %v989
          %v1123 = vpop.f32.mrb[0].mxu0
          %v1124 = vadd.f32 %v1015, %v1123
          %v1125 = vpop.f32.mrb[0].mxu0
          %v1126 = vpop.f32.mrb[0].mxu0
          %v1127 = vadd.f32 %v1015, %v1126
          %v1128 = vpop.f32.mrb[0].mxu0
          %1129 = vmatprep.mubr.bf16.mxu0 0
          %1130 = vmatmul.mubr.bf16.gmra.mrb[0].mxu0 %v990
          %v1131 = vpop.f32.mrb[0].mxu0
          %v1132 = vadd.f32 %v1015, %v1131
          %v1133 = vpop.f32.mrb[0].mxu0
          %v1134 = vpop.f32.mrb[0].mxu0
          %v1135 = vadd.f32 %v1015, %v1134
          %v1136 = vpop.f32.mrb[0].mxu0
          %1137 = vmatprep.mubr.bf16.mxu0 0
          %1138 = vmatmul.mubr.bf16.gmra.mrb[0].mxu0 %v991
          %v1139 = vpop.f32.mrb[0].mxu0
          %v1140 = vadd.f32 %v1015, %v1139
          %v1141 = vpop.f32.mrb[0].mxu0
          %v1142 = vpop.f32.mrb[0].mxu0
          %v1143 = vadd.f32 %v1015, %v1142
          %v1144 = vpop.f32.mrb[0].mxu0
          %1145 = vmatprep.mubr.bf16.mxu0 0
          %1146 = vmatmul.mubr.bf16.gmra.mrb[0].mxu0 %v992
          %v1147 = vpop.f32.mrb[0].mxu0
          %v1148 = vadd.f32 %v1015, %v1147
          %v1149 = vpop.f32.mrb[0].mxu0
          %v1150 = vpop.f32.mrb[0].mxu0
          %v1151 = vadd.f32 %v1015, %v1150
          %v1152 = vpop.f32.mrb[0].mxu0
          %1153 = vmatprep.mubr.bf16.mxu0 0
          %1154 = vmatmul.mubr.bf16.gmra.mrb[0].mxu0 %v993
          %v1155 = vpop.f32.mrb[0].mxu0
          %v1156 = vadd.f32 %v1015, %v1155
          %v1157 = vpop.f32.mrb[0].mxu0
          %v1158 = vpop.f32.mrb[0].mxu0
          %v1159 = vadd.f32 %v1015, %v1158
          %v1160 = vpop.f32.mrb[0].mxu0
          %1161 = vdwg.mxu0
          %v1162 = vmax.f32 %v1100, 0.0
          %v1163 = vmax.f32 %v1103, 0.0
          %v1164 = vmax.f32 %v1108, 0.0
          %v1165 = vmax.f32 %v1111, 0.0
          %v1166 = vmax.f32 %v1116, 0.0
          %v1167 = vmax.f32 %v1119, 0.0
          %v1168 = vmax.f32 %v1124, 0.0
          %v1169 = vmax.f32 %v1127, 0.0
          %v1170 = vmax.f32 %v1132, 0.0
          %v1171 = vmax.f32 %v1135, 0.0
          %v1172 = vmax.f32 %v1140, 0.0
          %v1173 = vmax.f32 %v1143, 0.0
          %v1174 = vmax.f32 %v1148, 0.0
          %v1175 = vmax.f32 %v1151, 0.0
          %v1176 = vmax.f32 %v1156, 0.0
          %v1177 = vmax.f32 %v1159, 0.0
          %v1178 = vpack.c.bf16 %v1163, %v1162
          %v1179 = vpack.c.bf16 %v1165, %v1164
          %v1180 = vpack.c.bf16 %v1167, %v1166
          %v1181 = vpack.c.bf16 %v1169, %v1168
          %v1182 = vpack.c.bf16 %v1171, %v1170
          %v1183 = vpack.c.bf16 %v1173, %v1172
          %v1184 = vpack.c.bf16 %v1175, %v1174
          %v1185 = vpack.c.bf16 %v1177, %v1176
          %s1186 = sshra.s32 %s368, 4
          %s1187 = sand.u32 %s368, 15
          %s1188 = smul.addr %s1186, 8
          %s1189 = scalar_lea.vmem [#allocation2], %s1188
          %1190 = vst [vmem:[%s1189] sm:$0xff] %v1178
          %1191 = vst [vmem:[%s1189 + $0x8] sm:$0xff] %v1179
          %1192 = vst [vmem:[%s1189 + $0x10] sm:$0xff] %v1180
          %1193 = vst [vmem:[%s1189 + $0x18] sm:$0xff] %v1181
          %1194 = vst [vmem:[%s1189 + $0x20] sm:$0xff] %v1182
          %1195 = vst [vmem:[%s1189 + $0x28] sm:$0xff] %v1183
          %1196 = vst [vmem:[%s1189 + $0x30] sm:$0xff] %v1184
          %1197 = vst [vmem:[%s1189 + $0x38] sm:$0xff] %v1185
          // Predicated region
          $region81: #{tpu_custom_call.1} parent=79 // pred_check
            %p1198 = pneg %p341
          $region82: #{tpu_custom_call.1} parent=79 // pred_check_branch
            %1200 = sbr.rel (%p1198) target = $region84
          $region83: #{tpu_custom_call.1} parent=79 // pred_region
            %v1201 = vld [vmem:[#allocation4] sm:$0xff]
            %v1202 = vld [vmem:[%s339] sm:$0xf]
            %1203 = vmatprep.subr.bf16.mxu0 0
            %1204 = vmatpush1.bf16.msra.mxu0 %v1178
            %1205 = vmatprep.subr.bf16.mxu0 0
            %1206 = vmatpush1.bf16.msra.mxu0 %v1179
            %1207 = vmatprep.subr.bf16.mxu0 0
            %1208 = vmatpush1.bf16.msra.mxu0 %v1180
            %1209 = vmatprep.subr.bf16.mxu0 0
            %1210 = vmatpush1.bf16.msra.mxu0 %v1181
            %1211 = vmatprep.subr.bf16.mxu0 0
            %1212 = vmatpush1.bf16.msra.mxu0 %v1182
            %1213 = vmatprep.subr.bf16.mxu0 0
            %1214 = vmatpush1.bf16.msra.mxu0 %v1183
            %1215 = vmatprep.subr.bf16.mxu0 0
            %1216 = vmatpush1.bf16.msra.mxu0 %v1184
            %1217 = vmatprep.subr.bf16.mxu0 0
            %1218 = vmatpush1.bf16.msra.mxu0 %v1185
            %1219 = vmatprep.subr.bf16.mxu0 0
            %1220 = vmatpush1.bf16.msra.mxu0 0
            %1221 = vmatprep.subr.bf16.mxu0 0
            %1222 = vmatpush1.bf16.msra.mxu0 0
            %1223 = vmatprep.subr.bf16.mxu0 0
            %1224 = vmatpush1.bf16.msra.mxu0 0
            %1225 = vmatprep.subr.bf16.mxu0 0
            %1226 = vmatpush1.bf16.msra.mxu0 0
            %1227 = vmatprep.subr.bf16.mxu0 0
            %1228 = vmatpush1.bf16.msra.mxu0 0
            %1229 = vmatprep.subr.bf16.mxu0 0
            %1230 = vmatpush1.bf16.msra.mxu0 0
            %1231 = vmatprep.subr.bf16.mxu0 0
            %1232 = vmatpush1.bf16.msra.mxu0 0
            %1233 = vmatprep.subr.bf16.mxu0 0
            %1234 = vmatpush1.bf16.msra.mxu0 0
            %1235 = vmatprep.mubr.bf16.mxu0 0
            %1236 = vmatmul.mubr.bf16.gmra.mrb[0].mxu0 %v1202
            %v1237 = vpop.f32.mrb[0].mxu0
            %v1238 = vadd.f32 0.0, %v1237
            %v1239 = vpop.f32.mrb[0].mxu0
            %v1240 = vpop.f32.mrb[0].mxu0
            %v1241 = vpop.f32.mrb[0].mxu0
            %1242 = vdwg.mxu0
            %v1243 = vadd.f32 %v1201, %v1238
            %1244 = vst [vmem:[#allocation4] sm:$0xff] %v1243
          $region84: #{tpu_custom_call.1} parent=79 // pred_fallthru
            _
        $region80: #{tpu_custom_call.1} parent=43 // pred_fallthru
          _
        // Predicated region
        $region85: #{tpu_custom_call.1} parent=43 // pred_check
          _
        $region86: #{tpu_custom_call.1} parent=43 // pred_check_branch
          %1246 = sbr.rel (%p363) target = $region88
        $region87: #{tpu_custom_call.1} parent=43 // pred_region
          %v1247 = vld [vmem:[#allocation4] sm:$0xff]
          %v1248 = vpack.c.bf16 %v1247, %v1247
          %v1249 = vld [vmem:[#allocation11] sm:$0xf]
          %v1250 = vld [vmem:[#allocation11 + $0x4] sm:$0xf]
          %v1251 = vld [vmem:[#allocation11 + $0x8] sm:$0xf]
          %v1252 = vld [vmem:[#allocation11 + $0xc] sm:$0xf]
          %v1253 = vld [vmem:[#allocation11 + $0x10] sm:$0xf]
          %v1254 = vld [vmem:[#allocation11 + $0x14] sm:$0xf]
          %v1255 = vld [vmem:[#allocation11 + $0x18] sm:$0xf]
          %v1256 = vld [vmem:[#allocation11 + $0x1c] sm:$0xf]
          %v1257 = vld [vmem:[#allocation11 + $0x20] sm:$0xf]
          %v1258 = vld [vmem:[#allocation11 + $0x24] sm:$0xf]
          %v1259 = vld [vmem:[#allocation11 + $0x28] sm:$0xf]
          %v1260 = vld [vmem:[#allocation11 + $0x2c] sm:$0xf]
          %v1261 = vld [vmem:[#allocation11 + $0x30] sm:$0xf]
          %v1262 = vld [vmem:[#allocation11 + $0x34] sm:$0xf]
          %v1263 = vld [vmem:[#allocation11 + $0x38] sm:$0xf]
          %v1264 = vld [vmem:[#allocation11 + $0x3c] sm:$0xf]
          %v1265 = vld [vmem:[%s6] sm:$0x1]
          %v1267 = vlaneseq
          %v1268 = vshrl.u32 %v1267, 7
          %v1269 = vsub.s32 0, %v1268
          %v1270 = vrot.slane %v1265, %v1269
          %v1288 = vunpack.c.l.b16 %v1249
          %v1289 = vunpack.c.l.b16 %v1250
          %v1290 = vunpack.c.l.b16 %v1251
          %v1291 = vunpack.c.l.b16 %v1252
          %v1292 = vunpack.c.l.b16 %v1253
          %v1293 = vunpack.c.l.b16 %v1254
          %v1294 = vunpack.c.l.b16 %v1255
          %v1295 = vunpack.c.l.b16 %v1256
          %v1296 = vunpack.c.l.b16 %v1257
          %v1297 = vunpack.c.l.b16 %v1258
          %v1298 = vunpack.c.l.b16 %v1259
          %v1299 = vunpack.c.l.b16 %v1260
          %v1300 = vunpack.c.l.b16 %v1261
          %v1301 = vunpack.c.l.b16 %v1262
          %v1302 = vunpack.c.l.b16 %v1263
          %v1303 = vunpack.c.l.b16 %v1264
          %v1304 = vpack.c.b16 %v1289, %v1288
          %v1305 = vpack.c.b16 %v1291, %v1290
          %v1306 = vpack.c.b16 %v1293, %v1292
          %v1307 = vpack.c.b16 %v1295, %v1294
          %v1308 = vpack.c.b16 %v1297, %v1296
          %v1309 = vpack.c.b16 %v1299, %v1298
          %v1310 = vpack.c.b16 %v1301, %v1300
          %v1311 = vpack.c.b16 %v1303, %v1302
          %1320 = vmatprep.subr.bf16.mxu0 0
          %1321 = vmatpush1.bf16.msra.mxu0 %v1304
          %1322 = vmatprep.subr.bf16.mxu0 0
          %1323 = vmatpush1.bf16.msra.mxu0 %v1305
          %1324 = vmatprep.subr.bf16.mxu0 0
          %1325 = vmatpush1.bf16.msra.mxu0 %v1306
          %1326 = vmatprep.subr.bf16.mxu0 0
          %1327 = vmatpush1.bf16.msra.mxu0 %v1307
          %1328 = vmatprep.subr.bf16.mxu0 0
          %1329 = vmatpush1.bf16.msra.mxu0 %v1308
          %1330 = vmatprep.subr.bf16.mxu0 0
          %1331 = vmatpush1.bf16.msra.mxu0 %v1309
          %1332 = vmatprep.subr.bf16.mxu0 0
          %1333 = vmatpush1.bf16.msra.mxu0 %v1310
          %1334 = vmatprep.subr.bf16.mxu0 0
          %1335 = vmatpush1.bf16.msra.mxu0 %v1311
          %1336 = vmatprep.subr.bf16.mxu0 0
          %1337 = vmatpush1.bf16.msra.mxu0 0
          %1338 = vmatprep.subr.bf16.mxu0 0
          %1339 = vmatpush1.bf16.msra.mxu0 0
          %1340 = vmatprep.subr.bf16.mxu0 0
          %1341 = vmatpush1.bf16.msra.mxu0 0
          %1342 = vmatprep.subr.bf16.mxu0 0
          %1343 = vmatpush1.bf16.msra.mxu0 0
          %1344 = vmatprep.subr.bf16.mxu0 0
          %1345 = vmatpush1.bf16.msra.mxu0 0
          %1346 = vmatprep.subr.bf16.mxu0 0
          %1347 = vmatpush1.bf16.msra.mxu0 0
          %1348 = vmatprep.subr.bf16.mxu0 0
          %1349 = vmatpush1.bf16.msra.mxu0 0
          %1350 = vmatprep.subr.bf16.mxu0 0
          %1351 = vmatpush1.bf16.msra.mxu0 0
          %1352 = vmatprep.mubr.bf16.mxu0 0
          %1353 = vmatmul.mubr.bf16.gmra.mrb[0].mxu0 %v1248
          %v1354 = vpop.f32.mrb[0].mxu0
          %v1355 = vadd.f32 %v1270, %v1354
          %v1356 = vpop.f32.mrb[0].mxu0
          %v1357 = vpop.f32.mrb[0].mxu0
          %v1358 = vpop.f32.mrb[0].mxu0
          %1359 = vdwg.mxu0
          %v1360 = vlaneseq
          %v1361 = vand.u32 %v1360, 127
          %vm1362 = vcmp.lt.s32.totalorder %v1361, 2
          %v1363 = vsel %vm1362, %v1355, -3.4028235e+38
          %1364 = vmax.xlane.f32.xlu0 %v1363
          %v1365 = vpop.xlane.xlu0 %1364
          %v1366 = vsub.f32 %v1363, %v1365
          %v1367 = vmul.f32 %v1366, 1.442695
          %v1368 = vpow.pop %v1367
          %v1369 = vsel %vm1362, %v1368, 0.0
          %1370 = vadd.xlane.f32.xlu0 %v1369
          %v1371 = vpop.xlane.xlu0 %1370
          %v1372 = vlog2.pop %v1371
          %v1373 = vmul.f32 %v1372, 0.6931472
          %v1374 = vsub.f32 %v1366, %v1373
          %1375 = vst [vmem:[#allocation12] sm:$0xff] %v1374
        $region88: #{tpu_custom_call.1} parent=43 // pred_fallthru
          _
        // Predicated region
        $region89: #{tpu_custom_call.1} parent=43 // pred_check
          %p1376 = pneg %p194
        $region90: #{tpu_custom_call.1} parent=43 // pred_check_branch
          %1378 = sbr.rel (%p1376) target = $region92
        $region91: #{tpu_custom_call.1} parent=43 // pred_region
          %s1380 = ssub.s32 128, 128
          %1381 = vsyncadd [#allocation8], %s1380
          %s1383 = sshll.u32 [#allocation12], 4
          %s1384 = int_to_ptr.vmem [resolvable:$true] %s1383
          %1386 = dma.vmem_to_hbm [thread:$0]  %s1384, 128, %s7, [#allocation8]
        $region92: #{tpu_custom_call.1} parent=43 // pred_fallthru
          _
        // Predicated region
        $region93: #{tpu_custom_call.1} parent=43 // pred_check
          %p1387 = pneg %p194
        $region94: #{tpu_custom_call.1} parent=43 // pred_check_branch
          %1389 = sbr.rel (%p1387) target = $region96
        $region95: #{tpu_custom_call.1} parent=43 // pred_region
          %1390 = dma.done [#allocation8], 128
        $region96: #{tpu_custom_call.1} parent=43 // pred_fallthru
          _
      $region44: #{tpu_custom_call.1} parent=5 // pred_fallthru
        _
      %p1391 = scmp.le.s32.totalorder 2, %s18
      // Predicated region
      $region97: #{tpu_custom_call.1} parent=5 // pred_check
        %p1392 = pneg %p1391
      $region98: #{tpu_custom_call.1} parent=5 // pred_check_branch
        %1394 = sbr.rel (%p1392) target = $region100
      $region99: #{tpu_custom_call.1} parent=5 // pred_region
        %s1395 = ssub.s32 %s18, 2
      $region100: #{tpu_custom_call.1} parent=5 // pred_fallthru
        _
    $region6: #{tpu_custom_call.1} parent=1 // loop_footer
      %s22 = sadd.s32 1, %s18
    $region7: #{tpu_custom_call.1} parent=1 // loop_footer_branch
      %17 = sbr.rel target = $region3
    $region8: #{tpu_custom_call.1} parent=1 // loop_exit
      _
    %1396 = vsyncpa [#allocation7], 1
    %s1397 = scalar_lea.sflag [#allocation7], 1
    %1398 = vsyncpa %s1397, 1
    %1399 = vsyncpa [#allocation10], 1
    %s1400 = scalar_lea.sflag [#allocation10], 1
    %1401 = vsyncpa %s1400, 1
    %1402 = vsyncpa [#allocation8], 1
    %s1403 = scalar_lea.sflag [#allocation8], 1
    %1404 = vsyncpa %s1403, 1
  %1405 = vsyncmov [#allocation5]
  %s1406 = vpop.sfrf %1405
  %p1407 = scmp.eq.s32.totalorder %s1406, 0
  %p1408 = pneg %p1407
  %1410 = shalt.err (%p1408)

</llo_original>
